<compile_context>
chip_gen: v7x
topology: tpu7x:2x2x1
jax: 0.10.0
libtpu: 0.0.40
codegen_flags: <defaults>
</compile_context>

<pallas_src>
import functools

import jax
import jax.numpy as jnp
from jax.experimental import pallas as pl
from jax.experimental.pallas import tpu as pltpu


# ----------------------------------------------------------------------------
# Kernel
# ----------------------------------------------------------------------------
def _text_subnet_kernel(x_ref, wih_ref, whh_ref, b_ref, wlin_ref, blin_ref,
                        y_ref, h_scr, c_scr, xw_scr):
    """Grid = (batch_blocks, time_blocks); time is sequential ('arbitrary')."""
    t_blk = pl.program_id(1)
    n_tblk = pl.num_programs(1)

    Tc, Bb, D = x_ref.shape          # static block shape
    Hp = h_scr.shape[-1]             # padded hidden (multiple of 128)
    mm_dtype = wih_ref.dtype         # matmul operand dtype (f32 or bf16)

    # Reset the carried (h, c) state at the start of each sequence.
    @pl.when(t_blk == 0)
    def _():
        h_scr[...] = jnp.zeros_like(h_scr)
        c_scr[...] = jnp.zeros_like(c_scr)

    # ---- Batched input projection: one big GEMM for the whole time block ----
    # (Tc*Bb, D) @ (D, 4*Hp) + bias    (bias broadcast hoisted out of the loop)
    x2d = x_ref[...].reshape(Tc * Bb, D).astype(mm_dtype)
    xw = jnp.dot(x2d, wih_ref[...], preferred_element_type=jnp.float32)
    xw_scr[...] = xw + b_ref[...]

    whh = whh_ref[...]               # (Hp, 4*Hp), VMEM-resident

    # ---- Sequential recurrence: only h @ W_hh^T + gate math per step --------
    def step(s, carry):
        h, c = carry
        row0 = pl.multiple_of(s * Bb, Bb)           # sublane-aligned slice
        gates = xw_scr[pl.ds(row0, Bb), :] + jnp.dot(
            h.astype(mm_dtype), whh, preferred_element_type=jnp.float32)
        # PyTorch gate order: i, f, g, o  (each a full Hp = 128k lane block)
        i = jax.nn.sigmoid(gates[:, 0 * Hp:1 * Hp])
        f = jax.nn.sigmoid(gates[:, 1 * Hp:2 * Hp])
        g = jnp.tanh(gates[:, 2 * Hp:3 * Hp])
        o = jax.nn.sigmoid(gates[:, 3 * Hp:4 * Hp])
        c_new = f * c + i * g
        h_new = o * jnp.tanh(c_new)
        return h_new, c_new

    h, c = jax.lax.fori_loop(0, Tc, step, (h_scr[...], c_scr[...]),
                             unroll=True)

    # Carry (h, c) to the next time block; skip the store on the last block.
    @pl.when(t_blk < n_tblk - 1)
    def _():
        h_scr[...] = h
        c_scr[...] = c

    # ---- Final step: dropout(p=0.0) == identity, then the output Linear -----
    @pl.when(t_blk == n_tblk - 1)
    def _():
        y_ref[...] = (jnp.dot(h.astype(mm_dtype), wlin_ref[...],
                              preferred_element_type=jnp.float32)
                      + blin_ref[...])


# ----------------------------------------------------------------------------
# Wrapper
# ----------------------------------------------------------------------------
def _round_up(n, m):
    return ((n + m - 1) // m) * m


def _pad_axis(a, axis, new_size):
    pad = [(0, 0)] * a.ndim
    pad[axis] = (0, new_size - a.shape[axis])
    return jnp.pad(a, pad)


def text_subnet_forward(x, params, *, time_block=128, batch_block=None,
                        matmul_dtype=jnp.float32):
    """x: (B, T, D) float32, batch_first -- matches the PyTorch module.

    params hold the raw PyTorch-shaped tensors:
      w_ih (4H, D), w_hh (4H, H), b_ih (4H,), b_hh (4H,),
      w_lin (O, H), b_lin (O,)
    """
    B, T, D = x.shape
    w_ih, w_hh = params["w_ih"], params["w_hh"]
    bias = params["b_ih"] + params["b_hh"]
    w_lin, b_lin = params["w_lin"], params["b_lin"]
    H = w_hh.shape[1]
    O = w_lin.shape[0]

    # --- padding for TPU layout: lanes (128) for H/O, sublanes (8) for batch --
    Hp = _round_up(H, 128)
    Op = _round_up(O, 128)
    Bp = _round_up(B, 8)
    Bb = Bp if batch_block is None else batch_block
    assert Bb % 8 == 0 and Bp % Bb == 0
    nb = Bp // Bb

    # time blocking: largest divisor of T that is <= time_block (no zero-pad of
    # time -- a zero input is NOT an identity step for an LSTM)
    Tc = max(1, min(T, time_block))
    while T % Tc:
        Tc -= 1
    nt = T // Tc

    # --- gate-blocked padding of the LSTM weights (keeps i/f/g/o order) ------
    def pad_gate_rows(w):                      # (4H, X) -> (4*Hp, X)
        w = w.reshape(4, H, -1)
        w = _pad_axis(w, 1, Hp)
        return w.reshape(4 * Hp, w.shape[-1])

    wih_t = pad_gate_rows(w_ih).T.astype(matmul_dtype)                   # (D, 4Hp)
    whh_t = _pad_axis(pad_gate_rows(w_hh), 1, Hp).T.astype(matmul_dtype)  # (Hp, 4Hp)
    b2 = pad_gate_rows(bias[:, None])[:, 0][None, :].astype(jnp.float32)  # (1, 4Hp)
    wlin_t = _pad_axis(_pad_axis(w_lin, 0, Op), 1, Hp).T.astype(matmul_dtype)  # (Hp, Op)
    blin2 = _pad_axis(b_lin, 0, Op)[None, :].astype(jnp.float32)          # (1, Op)

    # time-major, batch padded to a full sublane multiple
    x_tm = _pad_axis(jnp.transpose(x, (1, 0, 2)), 1, Bp)                  # (T, Bp, D)

    grid_spec = pltpu.PrefetchScalarGridSpec(
        num_scalar_prefetch=0,
        grid=(nb, nt),
        in_specs=[
            # time-blocked input, pipelined over the (sequential) time axis
            pl.BlockSpec((Tc, Bb, D), lambda b, t: (t, b, 0)),
            # constant weights: VMEM-resident, single-buffered (no re-DMA)
            pl.BlockSpec(memory_space=pltpu.MemorySpace.VMEM),   # W_ih^T
            pl.BlockSpec(memory_space=pltpu.MemorySpace.VMEM),   # W_hh^T
            pl.BlockSpec(memory_space=pltpu.MemorySpace.VMEM),   # bias
            pl.BlockSpec(memory_space=pltpu.MemorySpace.VMEM),   # W_lin^T
            pl.BlockSpec(memory_space=pltpu.MemorySpace.VMEM),   # b_lin
        ],
        out_specs=pl.BlockSpec((Bb, Op), lambda b, t: (b, 0)),   # lane-dense
        scratch_shapes=[
            pltpu.VMEM((Bb, Hp), jnp.float32),           # h state (carried)
            pltpu.VMEM((Bb, Hp), jnp.float32),           # c state (carried)
            pltpu.VMEM((Tc * Bb, 4 * Hp), jnp.float32),  # precomputed x-projection
        ],
    )

    y_pad = pl.pallas_call(
        _text_subnet_kernel,
        out_shape=jax.ShapeDtypeStruct((Bp, Op), jnp.float32),
        grid_spec=grid_spec,
        compiler_params=pltpu.CompilerParams(
            dimension_semantics=("parallel", "arbitrary"),
            vmem_limit_bytes=32 * 1024 * 1024,
        ),
    )(x_tm, wih_t, whh_t, b2, wlin_t, blin2)

    return y_pad[:B, :O]


# ----------------------------------------------------------------------------
# Parameters (PyTorch LSTM / Linear shapes) + pure-JAX reference
# ----------------------------------------------------------------------------
def init_params(key, in_size, hidden_size, out_size):
    k = jax.random.split(key, 6)
    s = float(hidden_size) ** -0.5

    def u(kk, shape):
        return jax.random.uniform(kk, shape, minval=-s, maxval=s,
                                  dtype=jnp.float32)

    return {
        "w_ih": u(k[0], (4 * hidden_size, in_size)),
        "w_hh": u(k[1], (4 * hidden_size, hidden_size)),
        "b_ih": u(k[2], (4 * hidden_size,)),
        "b_hh": u(k[3], (4 * hidden_size,)),
        "w_lin": u(k[4], (out_size, hidden_size)),
        "b_lin": u(k[5], (out_size,)),
    }


def _reference_forward(x, params):
    """Pure-JAX reference of the PyTorch forward (sanity check)."""
    B, T, D = x.shape
    H = params["w_hh"].shape[1]
    b = params["b_ih"] + params["b_hh"]
    h = jnp.zeros((B, H), jnp.float32)
    c = jnp.zeros((B, H), jnp.float32)
    for t in range(T):
        gates = x[:, t, :] @ params["w_ih"].T + h @ params["w_hh"].T + b
        i = jax.nn.sigmoid(gates[:, 0 * H:1 * H])
        f = jax.nn.sigmoid(gates[:, 1 * H:2 * H])
        g = jnp.tanh(gates[:, 2 * H:3 * H])
        o = jax.nn.sigmoid(gates[:, 3 * H:4 * H])
        c = f * c + i * g
        h = o * jnp.tanh(c)
    # dropout p=0.0 (num_layers == 1) -> identity
    return h @ params["w_lin"].T + params["b_lin"]


if __name__ == "__main__":
    B, T = 2, 8
    in_size, hidden_size, out_size = 32, 32, 16

    key = jax.random.PRNGKey(0)
    kx, kp = jax.random.split(key)
    x = jax.random.normal(kx, (B, T, in_size), dtype=jnp.float32)
    params = init_params(kp, in_size, hidden_size, out_size)

    fwd = jax.jit(functools.partial(text_subnet_forward))
    y = jax.block_until_ready(fwd(x, params))

    y_ref = _reference_forward(x, params)
    assert y.shape == (B, out_size)
    err = float(jnp.max(jnp.abs(y - y_ref)))
    assert jnp.allclose(y, y_ref, atol=1e-4, rtol=1e-4), err

    print("KERNEL_OK")
</pallas_src>

<mosaic_0001>
module attributes {stable_mosaic.version = 11 : i64} {
  func.func @_text_subnet_kernel(%arg0: i32, %arg1: i32, %arg2: memref<8x8x32xf32, #tpu.memory_space<vmem>>, %arg3: memref<32x512xf32, #tpu.memory_space<vmem>>, %arg4: memref<128x512xf32, #tpu.memory_space<vmem>>, %arg5: memref<1x512xf32, #tpu.memory_space<vmem>>, %arg6: memref<128x128xf32, #tpu.memory_space<vmem>>, %arg7: memref<1x128xf32, #tpu.memory_space<vmem>>, %arg8: memref<8x128xf32, #tpu.memory_space<vmem>>, %arg9: memref<8x128xf32, #tpu.memory_space<vmem>>, %arg10: memref<8x128xf32, #tpu.memory_space<vmem>>, %arg11: memref<64x512xf32, #tpu.memory_space<vmem>>) attributes {dimension_semantics = [#tpu.dimension_semantics<parallel>, #tpu.dimension_semantics<arbitrary>], iteration_bounds = array<i64: 1, 1>, scalar_prefetch = 0 : i64, scratch_operands = 3 : i64, tpu.core_type = #tpu.core_type<tc>, window_params = [{transform_indices = @transform_0, window_bounds = array<i64: 8, 8, 32>}, {pipeline_mode = #tpu.pipeline_mode<synchronous>, transform_indices = @transform_1, window_bounds = array<i64: 32, 512>}, {pipeline_mode = #tpu.pipeline_mode<synchronous>, transform_indices = @transform_2, window_bounds = array<i64: 128, 512>}, {pipeline_mode = #tpu.pipeline_mode<synchronous>, transform_indices = @transform_3, window_bounds = array<i64: 1, 512>}, {pipeline_mode = #tpu.pipeline_mode<synchronous>, transform_indices = @transform_4, window_bounds = array<i64: 128, 128>}, {pipeline_mode = #tpu.pipeline_mode<synchronous>, transform_indices = @transform_5, window_bounds = array<i64: 1, 128>}, {transform_indices = @transform_6, window_bounds = array<i64: 8, 128>}]} {
    %c0_i32 = arith.constant 0 : i32
    %0 = arith.cmpi eq, %arg1, %c0_i32 : i32
    %1 = arith.extui %0 : i1 to i32
    %c0_i32_0 = arith.constant 0 : i32
    %2 = arith.cmpi ne, %1, %c0_i32_0 : i32
    scf.if %2 {
      %cst_68 = arith.constant 0.000000e+00 : f32
      %268 = vector.broadcast %cst_68 : f32 to vector<8x128xf32>
      %c0_69 = arith.constant 0 : index
      %c0_70 = arith.constant 0 : index
      %269 = vector.load %arg9[%c0_69, %c0_70] : memref<8x128xf32, #tpu.memory_space<vmem>>, vector<8x128xf32>
      tpu.vector_store %arg9[%c0_69, %c0_70], %268 {strides = array<i32>} : memref<8x128xf32, #tpu.memory_space<vmem>>, vector<8x128xf32>,
      %cst_71 = arith.constant 0.000000e+00 : f32
      %270 = vector.broadcast %cst_71 : f32 to vector<8x128xf32>
      %c0_72 = arith.constant 0 : index
      %c0_73 = arith.constant 0 : index
      %271 = vector.load %arg10[%c0_72, %c0_73] : memref<8x128xf32, #tpu.memory_space<vmem>>, vector<8x128xf32>
      tpu.vector_store %arg10[%c0_72, %c0_73], %270 {strides = array<i32>} : memref<8x128xf32, #tpu.memory_space<vmem>>, vector<8x128xf32>,
    } else {
    }
    %c0 = arith.constant 0 : index
    %c0_1 = arith.constant 0 : index
    %c0_2 = arith.constant 0 : index
    %3 = vector.load %arg2[%c0, %c0_1, %c0_2] : memref<8x8x32xf32, #tpu.memory_space<vmem>>, vector<8x8x32xf32>
    %4 = vector.shape_cast %3 : vector<8x8x32xf32> to vector<64x32xf32>
    %c0_3 = arith.constant 0 : index
    %c0_4 = arith.constant 0 : index
    %5 = vector.load %arg3[%c0_3, %c0_4] : memref<32x512xf32, #tpu.memory_space<vmem>>, vector<32x512xf32>
    %cst = arith.constant dense<0.000000e+00> : vector<64x512xf32>
    %6 = tpu.matmul %4, %5, %cst {dimension_numbers = #tpu.dot_dimension_numbers<[1], [0], [0], [1], [0, 0, 1, 1], [], []>} : vector<64x32xf32>, vector<32x512xf32>, vector<64x512xf32> -> vector<64x512xf32>
    %c0_5 = arith.constant 0 : index
    %c0_6 = arith.constant 0 : index
    %7 = vector.load %arg5[%c0_5, %c0_6] : memref<1x512xf32, #tpu.memory_space<vmem>>, vector<1x512xf32>
    %8 = vector.broadcast %7 : vector<1x512xf32> to vector<64x512xf32>
    %9 = arith.addf %6, %8 : vector<64x512xf32>
    %c0_7 = arith.constant 0 : index
    %c0_8 = arith.constant 0 : index
    %10 = vector.load %arg11[%c0_7, %c0_8] : memref<64x512xf32, #tpu.memory_space<vmem>>, vector<64x512xf32>
    tpu.vector_store %arg11[%c0_7, %c0_8], %9 {strides = array<i32>} : memref<64x512xf32, #tpu.memory_space<vmem>>, vector<64x512xf32>,
    %c0_9 = arith.constant 0 : index
    %c0_10 = arith.constant 0 : index
    %11 = vector.load %arg4[%c0_9, %c0_10] : memref<128x512xf32, #tpu.memory_space<vmem>>, vector<128x512xf32>
    %c0_11 = arith.constant 0 : index
    %c0_12 = arith.constant 0 : index
    %12 = vector.load %arg9[%c0_11, %c0_12] : memref<8x128xf32, #tpu.memory_space<vmem>>, vector<8x128xf32>
    %c0_13 = arith.constant 0 : index
    %c0_14 = arith.constant 0 : index
    %13 = vector.load %arg10[%c0_13, %c0_14] : memref<8x128xf32, #tpu.memory_space<vmem>>, vector<8x128xf32>
    %c0_i32_15 = arith.constant 0 : i32
    %c8_i32 = arith.constant 8 : i32
    %14 = arith.muli %c0_i32_15, %c8_i32 : i32
    %15 = tpu.assume_multiple %14, 8 : i32
    %16 = arith.index_cast %15 : i32 to index
    %c0_16 = arith.constant 0 : index
    %17 = vector.load %arg11[%16, %c0_16] : memref<64x512xf32, #tpu.memory_space<vmem>>, vector<8x512xf32>
    %cst_17 = arith.constant dense<0.000000e+00> : vector<8x512xf32>
    %18 = tpu.matmul %12, %11, %cst_17 {dimension_numbers = #tpu.dot_dimension_numbers<[1], [0], [0], [1], [0, 0, 1, 1], [], []>} : vector<8x128xf32>, vector<128x512xf32>, vector<8x512xf32> -> vector<8x512xf32>
    %19 = arith.addf %17, %18 : vector<8x512xf32>
    %20 = vector.extract_strided_slice %19 {offsets = [0, 0], sizes = [8, 128], strides = [1, 1]} : vector<8x512xf32> to vector<8x128xf32>
    %21 = arith.negf %20 : vector<8x128xf32>
    %22 = math.exp %21 : vector<8x128xf32>
    %cst_18 = arith.constant 1.000000e+00 : f32
    %23 = vector.broadcast %cst_18 : f32 to vector<8x128xf32>
    %24 = arith.addf %23, %22 : vector<8x128xf32>
    %25 = arith.divf %23, %24 : vector<8x128xf32>
    %26 = vector.extract_strided_slice %19 {offsets = [0, 128], sizes = [8, 128], strides = [1, 1]} : vector<8x512xf32> to vector<8x128xf32>
    %27 = arith.negf %26 : vector<8x128xf32>
    %28 = math.exp %27 : vector<8x128xf32>
    %cst_19 = arith.constant 1.000000e+00 : f32
    %29 = vector.broadcast %cst_19 : f32 to vector<8x128xf32>
    %30 = arith.addf %29, %28 : vector<8x128xf32>
    %31 = arith.divf %29, %30 : vector<8x128xf32>
    %32 = vector.extract_strided_slice %19 {offsets = [0, 256], sizes = [8, 128], strides = [1, 1]} : vector<8x512xf32> to vector<8x128xf32>
    %33 = math.tanh %32 : vector<8x128xf32>
    %34 = vector.extract_strided_slice %19 {offsets = [0, 384], sizes = [8, 128], strides = [1, 1]} : vector<8x512xf32> to vector<8x128xf32>
    %35 = arith.negf %34 : vector<8x128xf32>
    %36 = math.exp %35 : vector<8x128xf32>
    %cst_20 = arith.constant 1.000000e+00 : f32
    %37 = vector.broadcast %cst_20 : f32 to vector<8x128xf32>
    %38 = arith.addf %37, %36 : vector<8x128xf32>
    %39 = arith.divf %37, %38 : vector<8x128xf32>
    %40 = arith.mulf %31, %13 : vector<8x128xf32>
    %41 = arith.mulf %25, %33 : vector<8x128xf32>
    %42 = arith.addf %40, %41 : vector<8x128xf32>
    %43 = math.tanh %42 : vector<8x128xf32>
    %44 = arith.mulf %39, %43 : vector<8x128xf32>
    %c1_i32 = arith.constant 1 : i32
    %c8_i32_21 = arith.constant 8 : i32
    %45 = arith.muli %c1_i32, %c8_i32_21 : i32
    %46 = tpu.assume_multiple %45, 8 : i32
    %47 = arith.index_cast %46 : i32 to index
    %c0_22 = arith.constant 0 : index
    %48 = vector.load %arg11[%47, %c0_22] : memref<64x512xf32, #tpu.memory_space<vmem>>, vector<8x512xf32>
    %cst_23 = arith.constant dense<0.000000e+00> : vector<8x512xf32>
    %49 = tpu.matmul %44, %11, %cst_23 {dimension_numbers = #tpu.dot_dimension_numbers<[1], [0], [0], [1], [0, 0, 1, 1], [], []>} : vector<8x128xf32>, vector<128x512xf32>, vector<8x512xf32> -> vector<8x512xf32>
    %50 = arith.addf %48, %49 : vector<8x512xf32>
    %51 = vector.extract_strided_slice %50 {offsets = [0, 0], sizes = [8, 128], strides = [1, 1]} : vector<8x512xf32> to vector<8x128xf32>
    %52 = arith.negf %51 : vector<8x128xf32>
    %53 = math.exp %52 : vector<8x128xf32>
    %cst_24 = arith.constant 1.000000e+00 : f32
    %54 = vector.broadcast %cst_24 : f32 to vector<8x128xf32>
    %55 = arith.addf %54, %53 : vector<8x128xf32>
    %56 = arith.divf %54, %55 : vector<8x128xf32>
    %57 = vector.extract_strided_slice %50 {offsets = [0, 128], sizes = [8, 128], strides = [1, 1]} : vector<8x512xf32> to vector<8x128xf32>
    %58 = arith.negf %57 : vector<8x128xf32>
    %59 = math.exp %58 : vector<8x128xf32>
    %cst_25 = arith.constant 1.000000e+00 : f32
    %60 = vector.broadcast %cst_25 : f32 to vector<8x128xf32>
    %61 = arith.addf %60, %59 : vector<8x128xf32>
    %62 = arith.divf %60, %61 : vector<8x128xf32>
    %63 = vector.extract_strided_slice %50 {offsets = [0, 256], sizes = [8, 128], strides = [1, 1]} : vector<8x512xf32> to vector<8x128xf32>
    %64 = math.tanh %63 : vector<8x128xf32>
    %65 = vector.extract_strided_slice %50 {offsets = [0, 384], sizes = [8, 128], strides = [1, 1]} : vector<8x512xf32> to vector<8x128xf32>
    %66 = arith.negf %65 : vector<8x128xf32>
    %67 = math.exp %66 : vector<8x128xf32>
    %cst_26 = arith.constant 1.000000e+00 : f32
    %68 = vector.broadcast %cst_26 : f32 to vector<8x128xf32>
    %69 = arith.addf %68, %67 : vector<8x128xf32>
    %70 = arith.divf %68, %69 : vector<8x128xf32>
    %71 = arith.mulf %62, %42 : vector<8x128xf32>
    %72 = arith.mulf %56, %64 : vector<8x128xf32>
    %73 = arith.addf %71, %72 : vector<8x128xf32>
    %74 = math.tanh %73 : vector<8x128xf32>
    %75 = arith.mulf %70, %74 : vector<8x128xf32>
    %c2_i32 = arith.constant 2 : i32
    %c8_i32_27 = arith.constant 8 : i32
    %76 = arith.muli %c2_i32, %c8_i32_27 : i32
    %77 = tpu.assume_multiple %76, 8 : i32
    %78 = arith.index_cast %77 : i32 to index
    %c0_28 = arith.constant 0 : index
    %79 = vector.load %arg11[%78, %c0_28] : memref<64x512xf32, #tpu.memory_space<vmem>>, vector<8x512xf32>
    %cst_29 = arith.constant dense<0.000000e+00> : vector<8x512xf32>
    %80 = tpu.matmul %75, %11, %cst_29 {dimension_numbers = #tpu.dot_dimension_numbers<[1], [0], [0], [1], [0, 0, 1, 1], [], []>} : vector<8x128xf32>, vector<128x512xf32>, vector<8x512xf32> -> vector<8x512xf32>
    %81 = arith.addf %79, %80 : vector<8x512xf32>
    %82 = vector.extract_strided_slice %81 {offsets = [0, 0], sizes = [8, 128], strides = [1, 1]} : vector<8x512xf32> to vector<8x128xf32>
    %83 = arith.negf %82 : vector<8x128xf32>
    %84 = math.exp %83 : vector<8x128xf32>
    %cst_30 = arith.constant 1.000000e+00 : f32
    %85 = vector.broadcast %cst_30 : f32 to vector<8x128xf32>
    %86 = arith.addf %85, %84 : vector<8x128xf32>
    %87 = arith.divf %85, %86 : vector<8x128xf32>
    %88 = vector.extract_strided_slice %81 {offsets = [0, 128], sizes = [8, 128], strides = [1, 1]} : vector<8x512xf32> to vector<8x128xf32>
    %89 = arith.negf %88 : vector<8x128xf32>
    %90 = math.exp %89 : vector<8x128xf32>
    %cst_31 = arith.constant 1.000000e+00 : f32
    %91 = vector.broadcast %cst_31 : f32 to vector<8x128xf32>
    %92 = arith.addf %91, %90 : vector<8x128xf32>
    %93 = arith.divf %91, %92 : vector<8x128xf32>
    %94 = vector.extract_strided_slice %81 {offsets = [0, 256], sizes = [8, 128], strides = [1, 1]} : vector<8x512xf32> to vector<8x128xf32>
    %95 = math.tanh %94 : vector<8x128xf32>
    %96 = vector.extract_strided_slice %81 {offsets = [0, 384], sizes = [8, 128], strides = [1, 1]} : vector<8x512xf32> to vector<8x128xf32>
    %97 = arith.negf %96 : vector<8x128xf32>
    %98 = math.exp %97 : vector<8x128xf32>
    %cst_32 = arith.constant 1.000000e+00 : f32
    %99 = vector.broadcast %cst_32 : f32 to vector<8x128xf32>
    %100 = arith.addf %99, %98 : vector<8x128xf32>
    %101 = arith.divf %99, %100 : vector<8x128xf32>
    %102 = arith.mulf %93, %73 : vector<8x128xf32>
    %103 = arith.mulf %87, %95 : vector<8x128xf32>
    %104 = arith.addf %102, %103 : vector<8x128xf32>
    %105 = math.tanh %104 : vector<8x128xf32>
    %106 = arith.mulf %101, %105 : vector<8x128xf32>
    %c3_i32 = arith.constant 3 : i32
    %c8_i32_33 = arith.constant 8 : i32
    %107 = arith.muli %c3_i32, %c8_i32_33 : i32
    %108 = tpu.assume_multiple %107, 8 : i32
    %109 = arith.index_cast %108 : i32 to index
    %c0_34 = arith.constant 0 : index
    %110 = vector.load %arg11[%109, %c0_34] : memref<64x512xf32, #tpu.memory_space<vmem>>, vector<8x512xf32>
    %cst_35 = arith.constant dense<0.000000e+00> : vector<8x512xf32>
    %111 = tpu.matmul %106, %11, %cst_35 {dimension_numbers = #tpu.dot_dimension_numbers<[1], [0], [0], [1], [0, 0, 1, 1], [], []>} : vector<8x128xf32>, vector<128x512xf32>, vector<8x512xf32> -> vector<8x512xf32>
    %112 = arith.addf %110, %111 : vector<8x512xf32>
    %113 = vector.extract_strided_slice %112 {offsets = [0, 0], sizes = [8, 128], strides = [1, 1]} : vector<8x512xf32> to vector<8x128xf32>
    %114 = arith.negf %113 : vector<8x128xf32>
    %115 = math.exp %114 : vector<8x128xf32>
    %cst_36 = arith.constant 1.000000e+00 : f32
    %116 = vector.broadcast %cst_36 : f32 to vector<8x128xf32>
    %117 = arith.addf %116, %115 : vector<8x128xf32>
    %118 = arith.divf %116, %117 : vector<8x128xf32>
    %119 = vector.extract_strided_slice %112 {offsets = [0, 128], sizes = [8, 128], strides = [1, 1]} : vector<8x512xf32> to vector<8x128xf32>
    %120 = arith.negf %119 : vector<8x128xf32>
    %121 = math.exp %120 : vector<8x128xf32>
    %cst_37 = arith.constant 1.000000e+00 : f32
    %122 = vector.broadcast %cst_37 : f32 to vector<8x128xf32>
    %123 = arith.addf %122, %121 : vector<8x128xf32>
    %124 = arith.divf %122, %123 : vector<8x128xf32>
    %125 = vector.extract_strided_slice %112 {offsets = [0, 256], sizes = [8, 128], strides = [1, 1]} : vector<8x512xf32> to vector<8x128xf32>
    %126 = math.tanh %125 : vector<8x128xf32>
    %127 = vector.extract_strided_slice %112 {offsets = [0, 384], sizes = [8, 128], strides = [1, 1]} : vector<8x512xf32> to vector<8x128xf32>
    %128 = arith.negf %127 : vector<8x128xf32>
    %129 = math.exp %128 : vector<8x128xf32>
    %cst_38 = arith.constant 1.000000e+00 : f32
    %130 = vector.broadcast %cst_38 : f32 to vector<8x128xf32>
    %131 = arith.addf %130, %129 : vector<8x128xf32>
    %132 = arith.divf %130, %131 : vector<8x128xf32>
    %133 = arith.mulf %124, %104 : vector<8x128xf32>
    %134 = arith.mulf %118, %126 : vector<8x128xf32>
    %135 = arith.addf %133, %134 : vector<8x128xf32>
    %136 = math.tanh %135 : vector<8x128xf32>
    %137 = arith.mulf %132, %136 : vector<8x128xf32>
    %c4_i32 = arith.constant 4 : i32
    %c8_i32_39 = arith.constant 8 : i32
    %138 = arith.muli %c4_i32, %c8_i32_39 : i32
    %139 = tpu.assume_multiple %138, 8 : i32
    %140 = arith.index_cast %139 : i32 to index
    %c0_40 = arith.constant 0 : index
    %141 = vector.load %arg11[%140, %c0_40] : memref<64x512xf32, #tpu.memory_space<vmem>>, vector<8x512xf32>
    %cst_41 = arith.constant dense<0.000000e+00> : vector<8x512xf32>
    %142 = tpu.matmul %137, %11, %cst_41 {dimension_numbers = #tpu.dot_dimension_numbers<[1], [0], [0], [1], [0, 0, 1, 1], [], []>} : vector<8x128xf32>, vector<128x512xf32>, vector<8x512xf32> -> vector<8x512xf32>
    %143 = arith.addf %141, %142 : vector<8x512xf32>
    %144 = vector.extract_strided_slice %143 {offsets = [0, 0], sizes = [8, 128], strides = [1, 1]} : vector<8x512xf32> to vector<8x128xf32>
    %145 = arith.negf %144 : vector<8x128xf32>
    %146 = math.exp %145 : vector<8x128xf32>
    %cst_42 = arith.constant 1.000000e+00 : f32
    %147 = vector.broadcast %cst_42 : f32 to vector<8x128xf32>
    %148 = arith.addf %147, %146 : vector<8x128xf32>
    %149 = arith.divf %147, %148 : vector<8x128xf32>
    %150 = vector.extract_strided_slice %143 {offsets = [0, 128], sizes = [8, 128], strides = [1, 1]} : vector<8x512xf32> to vector<8x128xf32>
    %151 = arith.negf %150 : vector<8x128xf32>
    %152 = math.exp %151 : vector<8x128xf32>
    %cst_43 = arith.constant 1.000000e+00 : f32
    %153 = vector.broadcast %cst_43 : f32 to vector<8x128xf32>
    %154 = arith.addf %153, %152 : vector<8x128xf32>
    %155 = arith.divf %153, %154 : vector<8x128xf32>
    %156 = vector.extract_strided_slice %143 {offsets = [0, 256], sizes = [8, 128], strides = [1, 1]} : vector<8x512xf32> to vector<8x128xf32>
    %157 = math.tanh %156 : vector<8x128xf32>
    %158 = vector.extract_strided_slice %143 {offsets = [0, 384], sizes = [8, 128], strides = [1, 1]} : vector<8x512xf32> to vector<8x128xf32>
    %159 = arith.negf %158 : vector<8x128xf32>
    %160 = math.exp %159 : vector<8x128xf32>
    %cst_44 = arith.constant 1.000000e+00 : f32
    %161 = vector.broadcast %cst_44 : f32 to vector<8x128xf32>
    %162 = arith.addf %161, %160 : vector<8x128xf32>
    %163 = arith.divf %161, %162 : vector<8x128xf32>
    %164 = arith.mulf %155, %135 : vector<8x128xf32>
    %165 = arith.mulf %149, %157 : vector<8x128xf32>
    %166 = arith.addf %164, %165 : vector<8x128xf32>
    %167 = math.tanh %166 : vector<8x128xf32>
    %168 = arith.mulf %163, %167 : vector<8x128xf32>
    %c5_i32 = arith.constant 5 : i32
    %c8_i32_45 = arith.constant 8 : i32
    %169 = arith.muli %c5_i32, %c8_i32_45 : i32
    %170 = tpu.assume_multiple %169, 8 : i32
    %171 = arith.index_cast %170 : i32 to index
    %c0_46 = arith.constant 0 : index
    %172 = vector.load %arg11[%171, %c0_46] : memref<64x512xf32, #tpu.memory_space<vmem>>, vector<8x512xf32>
    %cst_47 = arith.constant dense<0.000000e+00> : vector<8x512xf32>
    %173 = tpu.matmul %168, %11, %cst_47 {dimension_numbers = #tpu.dot_dimension_numbers<[1], [0], [0], [1], [0, 0, 1, 1], [], []>} : vector<8x128xf32>, vector<128x512xf32>, vector<8x512xf32> -> vector<8x512xf32>
    %174 = arith.addf %172, %173 : vector<8x512xf32>
    %175 = vector.extract_strided_slice %174 {offsets = [0, 0], sizes = [8, 128], strides = [1, 1]} : vector<8x512xf32> to vector<8x128xf32>
    %176 = arith.negf %175 : vector<8x128xf32>
    %177 = math.exp %176 : vector<8x128xf32>
    %cst_48 = arith.constant 1.000000e+00 : f32
    %178 = vector.broadcast %cst_48 : f32 to vector<8x128xf32>
    %179 = arith.addf %178, %177 : vector<8x128xf32>
    %180 = arith.divf %178, %179 : vector<8x128xf32>
    %181 = vector.extract_strided_slice %174 {offsets = [0, 128], sizes = [8, 128], strides = [1, 1]} : vector<8x512xf32> to vector<8x128xf32>
    %182 = arith.negf %181 : vector<8x128xf32>
    %183 = math.exp %182 : vector<8x128xf32>
    %cst_49 = arith.constant 1.000000e+00 : f32
    %184 = vector.broadcast %cst_49 : f32 to vector<8x128xf32>
    %185 = arith.addf %184, %183 : vector<8x128xf32>
    %186 = arith.divf %184, %185 : vector<8x128xf32>
    %187 = vector.extract_strided_slice %174 {offsets = [0, 256], sizes = [8, 128], strides = [1, 1]} : vector<8x512xf32> to vector<8x128xf32>
    %188 = math.tanh %187 : vector<8x128xf32>
    %189 = vector.extract_strided_slice %174 {offsets = [0, 384], sizes = [8, 128], strides = [1, 1]} : vector<8x512xf32> to vector<8x128xf32>
    %190 = arith.negf %189 : vector<8x128xf32>
    %191 = math.exp %190 : vector<8x128xf32>
    %cst_50 = arith.constant 1.000000e+00 : f32
    %192 = vector.broadcast %cst_50 : f32 to vector<8x128xf32>
    %193 = arith.addf %192, %191 : vector<8x128xf32>
    %194 = arith.divf %192, %193 : vector<8x128xf32>
    %195 = arith.mulf %186, %166 : vector<8x128xf32>
    %196 = arith.mulf %180, %188 : vector<8x128xf32>
    %197 = arith.addf %195, %196 : vector<8x128xf32>
    %198 = math.tanh %197 : vector<8x128xf32>
    %199 = arith.mulf %194, %198 : vector<8x128xf32>
    %c6_i32 = arith.constant 6 : i32
    %c8_i32_51 = arith.constant 8 : i32
    %200 = arith.muli %c6_i32, %c8_i32_51 : i32
    %201 = tpu.assume_multiple %200, 8 : i32
    %202 = arith.index_cast %201 : i32 to index
    %c0_52 = arith.constant 0 : index
    %203 = vector.load %arg11[%202, %c0_52] : memref<64x512xf32, #tpu.memory_space<vmem>>, vector<8x512xf32>
    %cst_53 = arith.constant dense<0.000000e+00> : vector<8x512xf32>
    %204 = tpu.matmul %199, %11, %cst_53 {dimension_numbers = #tpu.dot_dimension_numbers<[1], [0], [0], [1], [0, 0, 1, 1], [], []>} : vector<8x128xf32>, vector<128x512xf32>, vector<8x512xf32> -> vector<8x512xf32>
    %205 = arith.addf %203, %204 : vector<8x512xf32>
    %206 = vector.extract_strided_slice %205 {offsets = [0, 0], sizes = [8, 128], strides = [1, 1]} : vector<8x512xf32> to vector<8x128xf32>
    %207 = arith.negf %206 : vector<8x128xf32>
    %208 = math.exp %207 : vector<8x128xf32>
    %cst_54 = arith.constant 1.000000e+00 : f32
    %209 = vector.broadcast %cst_54 : f32 to vector<8x128xf32>
    %210 = arith.addf %209, %208 : vector<8x128xf32>
    %211 = arith.divf %209, %210 : vector<8x128xf32>
    %212 = vector.extract_strided_slice %205 {offsets = [0, 128], sizes = [8, 128], strides = [1, 1]} : vector<8x512xf32> to vector<8x128xf32>
    %213 = arith.negf %212 : vector<8x128xf32>
    %214 = math.exp %213 : vector<8x128xf32>
    %cst_55 = arith.constant 1.000000e+00 : f32
    %215 = vector.broadcast %cst_55 : f32 to vector<8x128xf32>
    %216 = arith.addf %215, %214 : vector<8x128xf32>
    %217 = arith.divf %215, %216 : vector<8x128xf32>
    %218 = vector.extract_strided_slice %205 {offsets = [0, 256], sizes = [8, 128], strides = [1, 1]} : vector<8x512xf32> to vector<8x128xf32>
    %219 = math.tanh %218 : vector<8x128xf32>
    %220 = vector.extract_strided_slice %205 {offsets = [0, 384], sizes = [8, 128], strides = [1, 1]} : vector<8x512xf32> to vector<8x128xf32>
    %221 = arith.negf %220 : vector<8x128xf32>
    %222 = math.exp %221 : vector<8x128xf32>
    %cst_56 = arith.constant 1.000000e+00 : f32
    %223 = vector.broadcast %cst_56 : f32 to vector<8x128xf32>
    %224 = arith.addf %223, %222 : vector<8x128xf32>
    %225 = arith.divf %223, %224 : vector<8x128xf32>
    %226 = arith.mulf %217, %197 : vector<8x128xf32>
    %227 = arith.mulf %211, %219 : vector<8x128xf32>
    %228 = arith.addf %226, %227 : vector<8x128xf32>
    %229 = math.tanh %228 : vector<8x128xf32>
    %230 = arith.mulf %225, %229 : vector<8x128xf32>
    %c7_i32 = arith.constant 7 : i32
    %c8_i32_57 = arith.constant 8 : i32
    %231 = arith.muli %c7_i32, %c8_i32_57 : i32
    %232 = tpu.assume_multiple %231, 8 : i32
    %233 = arith.index_cast %232 : i32 to index
    %c0_58 = arith.constant 0 : index
    %234 = vector.load %arg11[%233, %c0_58] : memref<64x512xf32, #tpu.memory_space<vmem>>, vector<8x512xf32>
    %cst_59 = arith.constant dense<0.000000e+00> : vector<8x512xf32>
    %235 = tpu.matmul %230, %11, %cst_59 {dimension_numbers = #tpu.dot_dimension_numbers<[1], [0], [0], [1], [0, 0, 1, 1], [], []>} : vector<8x128xf32>, vector<128x512xf32>, vector<8x512xf32> -> vector<8x512xf32>
    %236 = arith.addf %234, %235 : vector<8x512xf32>
    %237 = vector.extract_strided_slice %236 {offsets = [0, 0], sizes = [8, 128], strides = [1, 1]} : vector<8x512xf32> to vector<8x128xf32>
    %238 = arith.negf %237 : vector<8x128xf32>
    %239 = math.exp %238 : vector<8x128xf32>
    %cst_60 = arith.constant 1.000000e+00 : f32
    %240 = vector.broadcast %cst_60 : f32 to vector<8x128xf32>
    %241 = arith.addf %240, %239 : vector<8x128xf32>
    %242 = arith.divf %240, %241 : vector<8x128xf32>
    %243 = vector.extract_strided_slice %236 {offsets = [0, 128], sizes = [8, 128], strides = [1, 1]} : vector<8x512xf32> to vector<8x128xf32>
    %244 = arith.negf %243 : vector<8x128xf32>
    %245 = math.exp %244 : vector<8x128xf32>
    %cst_61 = arith.constant 1.000000e+00 : f32
    %246 = vector.broadcast %cst_61 : f32 to vector<8x128xf32>
    %247 = arith.addf %246, %245 : vector<8x128xf32>
    %248 = arith.divf %246, %247 : vector<8x128xf32>
    %249 = vector.extract_strided_slice %236 {offsets = [0, 256], sizes = [8, 128], strides = [1, 1]} : vector<8x512xf32> to vector<8x128xf32>
    %250 = math.tanh %249 : vector<8x128xf32>
    %251 = vector.extract_strided_slice %236 {offsets = [0, 384], sizes = [8, 128], strides = [1, 1]} : vector<8x512xf32> to vector<8x128xf32>
    %252 = arith.negf %251 : vector<8x128xf32>
    %253 = math.exp %252 : vector<8x128xf32>
    %cst_62 = arith.constant 1.000000e+00 : f32
    %254 = vector.broadcast %cst_62 : f32 to vector<8x128xf32>
    %255 = arith.addf %254, %253 : vector<8x128xf32>
    %256 = arith.divf %254, %255 : vector<8x128xf32>
    %257 = arith.mulf %248, %228 : vector<8x128xf32>
    %258 = arith.mulf %242, %250 : vector<8x128xf32>
    %259 = arith.addf %257, %258 : vector<8x128xf32>
    %260 = math.tanh %259 : vector<8x128xf32>
    %261 = arith.mulf %256, %260 : vector<8x128xf32>
    %c8_i32_63 = arith.constant 8 : i32
    %c0_i32_64 = arith.constant 0 : i32
    %262 = arith.cmpi slt, %arg1, %c0_i32_64 : i32
    %263 = arith.extui %262 : i1 to i32
    %c0_i32_65 = arith.constant 0 : i32
    %264 = arith.cmpi ne, %263, %c0_i32_65 : i32
    scf.if %264 {
      %c0_68 = arith.constant 0 : index
      %c0_69 = arith.constant 0 : index
      %268 = vector.load %arg9[%c0_68, %c0_69] : memref<8x128xf32, #tpu.memory_space<vmem>>, vector<8x128xf32>
      tpu.vector_store %arg9[%c0_68, %c0_69], %261 {strides = array<i32>} : memref<8x128xf32, #tpu.memory_space<vmem>>, vector<8x128xf32>,
      %c0_70 = arith.constant 0 : index
      %c0_71 = arith.constant 0 : index
      %269 = vector.load %arg10[%c0_70, %c0_71] : memref<8x128xf32, #tpu.memory_space<vmem>>, vector<8x128xf32>
      tpu.vector_store %arg10[%c0_70, %c0_71], %259 {strides = array<i32>} : memref<8x128xf32, #tpu.memory_space<vmem>>, vector<8x128xf32>,
    } else {
    }
    %c0_i32_66 = arith.constant 0 : i32
    %265 = arith.cmpi eq, %arg1, %c0_i32_66 : i32
    %266 = arith.extui %265 : i1 to i32
    %c0_i32_67 = arith.constant 0 : i32
    %267 = arith.cmpi ne, %266, %c0_i32_67 : i32
    scf.if %267 {
      %c0_68 = arith.constant 0 : index
      %c0_69 = arith.constant 0 : index
      %268 = vector.load %arg6[%c0_68, %c0_69] : memref<128x128xf32, #tpu.memory_space<vmem>>, vector<128x128xf32>
      %cst_70 = arith.constant dense<0.000000e+00> : vector<8x128xf32>
      %269 = tpu.matmul %261, %268, %cst_70 {dimension_numbers = #tpu.dot_dimension_numbers<[1], [0], [0], [1], [0, 0, 1, 1], [], []>} : vector<8x128xf32>, vector<128x128xf32>, vector<8x128xf32> -> vector<8x128xf32>
      %c0_71 = arith.constant 0 : index
      %c0_72 = arith.constant 0 : index
      %270 = vector.load %arg7[%c0_71, %c0_72] : memref<1x128xf32, #tpu.memory_space<vmem>>, vector<1x128xf32>
      %271 = vector.broadcast %270 : vector<1x128xf32> to vector<8x128xf32>
      %272 = arith.addf %269, %271 : vector<8x128xf32>
      %c0_73 = arith.constant 0 : index
      %c0_74 = arith.constant 0 : index
      %273 = vector.load %arg8[%c0_73, %c0_74] : memref<8x128xf32, #tpu.memory_space<vmem>>, vector<8x128xf32>
      tpu.vector_store %arg8[%c0_73, %c0_74], %272 {strides = array<i32>} : memref<8x128xf32, #tpu.memory_space<vmem>>, vector<8x128xf32>,
    } else {
    }
    return
  }
  func.func @transform_0(%arg0: i32, %arg1: i32) -> (i32, i32, i32) {
    %c0_i32 = arith.constant 0 : i32
    %c0_i32_0 = arith.constant 0 : i32
    return %arg1, %arg0, %c0_i32 : i32, i32, i32
  }
  func.func @transform_1(%arg0: i32, %arg1: i32) -> (i32, i32) {
    %c0_i32 = arith.constant 0 : i32
    %c0_i32_0 = arith.constant 0 : i32
    %c0_i32_1 = arith.constant 0 : i32
    return %c0_i32, %c0_i32_0 : i32, i32
  }
  func.func @transform_2(%arg0: i32, %arg1: i32) -> (i32, i32) {
    %c0_i32 = arith.constant 0 : i32
    %c0_i32_0 = arith.constant 0 : i32
    %c0_i32_1 = arith.constant 0 : i32
    return %c0_i32, %c0_i32_0 : i32, i32
  }
  func.func @transform_3(%arg0: i32, %arg1: i32) -> (i32, i32) {
    %c0_i32 = arith.constant 0 : i32
    %c0_i32_0 = arith.constant 0 : i32
    %c0_i32_1 = arith.constant 0 : i32
    return %c0_i32, %c0_i32_0 : i32, i32
  }
  func.func @transform_4(%arg0: i32, %arg1: i32) -> (i32, i32) {
    %c0_i32 = arith.constant 0 : i32
    %c0_i32_0 = arith.constant 0 : i32
    %c0_i32_1 = arith.constant 0 : i32
    return %c0_i32, %c0_i32_0 : i32, i32
  }
  func.func @transform_5(%arg0: i32, %arg1: i32) -> (i32, i32) {
    %c0_i32 = arith.constant 0 : i32
    %c0_i32_0 = arith.constant 0 : i32
    %c0_i32_1 = arith.constant 0 : i32
    return %c0_i32, %c0_i32_0 : i32, i32
  }
  func.func @transform_6(%arg0: i32, %arg1: i32) -> (i32, i32) {
    %c0_i32 = arith.constant 0 : i32
    %c0_i32_0 = arith.constant 0 : i32
    return %arg0, %c0_i32 : i32, i32
  }
}

</mosaic_0001>

<llo_original>
// kernel: text_subnet_forward.1
$region0: #{text_subnet_forward.1}
  #allocation0 [shape = 'u32[]', space=smem, size = 0x4, offset = 0x4, fixed_abs, tag = 'smem constant byte address 0x4 - core index']
  #allocation1 [shape = 'u32[144,128]{1,0:T(1,128)}', space=vmem, size = 0x12000, scoped, tag = 'internal scratch']
  #allocation2 [shape = 'f32[8,128]{1,0:T(8,128)}', space=vmem, size = 0x1000, scoped, tag = 'scratch operand']
  #allocation3 [shape = 'f32[8,128]{1,0:T(8,128)}', space=vmem, size = 0x1000, scoped, tag = 'scratch operand']
  #allocation4 [shape = 'f32[64,512]{1,0:T(8,128)}', space=vmem, size = 0x20000, scoped, tag = 'scratch operand']
  %s0 = inlined_call_operand.vmem [shape: f32[8,8,32], index: 0, kind: input, shape index: {}]
  %s1 = inlined_call_operand.vmem [shape: f32[32,512], index: 1, kind: input, shape index: {}]
  %s2 = inlined_call_operand.vmem [shape: f32[128,512], index: 2, kind: input, shape index: {}]
  %s3 = inlined_call_operand.vmem [shape: f32[1,512], index: 3, kind: input, shape index: {}]
  %s4 = inlined_call_operand.vmem [shape: f32[128,128], index: 4, kind: input, shape index: {}]
  %s5 = inlined_call_operand.vmem [shape: f32[1,128], index: 5, kind: input, shape index: {}]
  %s6 = inlined_call_operand.vmem [shape: f32[8,128], index: 6, kind: output, shape index: {}]
  %s7 = sld [smem:[#allocation0]]
  $region46: #{text_subnet_forward.1} parent=0
    _
  %s9 = ssub.s32 1, %s7
  %s10 = scalar_select 0, %s9, %s7
  // Predicated region
  $region2: #{text_subnet_forward.1} parent=0 // pred_check
    _
  $region3: #{text_subnet_forward.1} parent=0 // pred_check_branch
    %12 = sbr.rel (0) target = $region5
  $region4: #{text_subnet_forward.1} parent=0 // pred_region
    _
  $region5: #{text_subnet_forward.1} parent=0 // pred_fallthru
    _
  // Predicated region
  $region6: #{text_subnet_forward.1} parent=0 // pred_check
    _
  $region7: #{text_subnet_forward.1} parent=0 // pred_check_branch
    %14 = sbr.rel (0) target = $region9
  $region8: #{text_subnet_forward.1} parent=0 // pred_region
    _
  $region9: #{text_subnet_forward.1} parent=0 // pred_fallthru
    _
  // Predicated region
  $region10: #{text_subnet_forward.1} parent=0 // pred_check
    _
  $region11: #{text_subnet_forward.1} parent=0 // pred_check_branch
    %16 = sbr.rel (0) target = $region13
  $region12: #{text_subnet_forward.1} parent=0 // pred_region
    _
  $region13: #{text_subnet_forward.1} parent=0 // pred_fallthru
    _
  // Predicated region
  $region14: #{text_subnet_forward.1} parent=0 // pred_check
    _
  $region15: #{text_subnet_forward.1} parent=0 // pred_check_branch
    %18 = sbr.rel (0) target = $region17
  $region16: #{text_subnet_forward.1} parent=0 // pred_region
    _
  $region17: #{text_subnet_forward.1} parent=0 // pred_fallthru
    _
  // Predicated region
  $region18: #{text_subnet_forward.1} parent=0 // pred_check
    _
  $region19: #{text_subnet_forward.1} parent=0 // pred_check_branch
    %20 = sbr.rel (0) target = $region21
  $region20: #{text_subnet_forward.1} parent=0 // pred_region
    _
  $region21: #{text_subnet_forward.1} parent=0 // pred_fallthru
    _
  // Predicated region
  $region22: #{text_subnet_forward.1} parent=0 // pred_check
    _
  $region23: #{text_subnet_forward.1} parent=0 // pred_check_branch
    %22 = sbr.rel (0) target = $region25
  $region24: #{text_subnet_forward.1} parent=0 // pred_region
    _
  $region25: #{text_subnet_forward.1} parent=0 // pred_fallthru
    _
  %p23 = scmp.eq.s32.totalorder 0, 0
  // Predicated region
  $region26: #{text_subnet_forward.1} parent=0 // pred_check
    %p24 = pneg %p23
  $region27: #{text_subnet_forward.1} parent=0 // pred_check_branch
    %26 = sbr.rel (%p24) target = $region29
  $region28: #{text_subnet_forward.1} parent=0 // pred_region
    %27 = vst [vmem:[#allocation2] sm:$0xff] 0.0
    %28 = vst [vmem:[#allocation3] sm:$0xff] 0.0
  $region29: #{text_subnet_forward.1} parent=0 // pred_fallthru
    _
  %v29 = vld [vmem:[%s0] sm:$0xff]
  %v30 = vld [vmem:[%s0 + $0x8] sm:$0xff]
  %v31 = vld [vmem:[%s0 + $0x10] sm:$0xff]
  %v32 = vld [vmem:[%s0 + $0x18] sm:$0xff]
  %v33 = vld [vmem:[%s0 + $0x20] sm:$0xff]
  %v34 = vld [vmem:[%s0 + $0x28] sm:$0xff]
  %v35 = vld [vmem:[%s0 + $0x30] sm:$0xff]
  %v36 = vld [vmem:[%s0 + $0x38] sm:$0xff]
  %v37 = vld [vmem:[%s1] sm:$0xff]
  %v38 = vld [vmem:[%s1 + $0x8] sm:$0xff]
  %v39 = vld [vmem:[%s1 + $0x10] sm:$0xff]
  %v40 = vld [vmem:[%s1 + $0x18] sm:$0xff]
  %v41 = vld [vmem:[%s1 + $0x20] sm:$0xff]
  %v42 = vld [vmem:[%s1 + $0x28] sm:$0xff]
  %v43 = vld [vmem:[%s1 + $0x30] sm:$0xff]
  %v44 = vld [vmem:[%s1 + $0x38] sm:$0xff]
  %v45 = vld [vmem:[%s1 + $0x40] sm:$0xff]
  %v46 = vld [vmem:[%s1 + $0x48] sm:$0xff]
  %v47 = vld [vmem:[%s1 + $0x50] sm:$0xff]
  %v48 = vld [vmem:[%s1 + $0x58] sm:$0xff]
  %v49 = vld [vmem:[%s1 + $0x60] sm:$0xff]
  %v50 = vld [vmem:[%s1 + $0x68] sm:$0xff]
  %v51 = vld [vmem:[%s1 + $0x70] sm:$0xff]
  %v52 = vld [vmem:[%s1 + $0x78] sm:$0xff]
  %v53 = vld [vmem:[%s3] sm:$0xf]
  %v55 = vlaneseq
  %v56 = vshrl.u32 %v55, 7
  %v57 = vsub.s32 0, %v56
  %v58 = vrot.slane %v53, %v57
  %v59 = vlaneseq
  %v60 = vshrl.u32 %v59, 7
  %v61 = vsub.s32 1, %v60
  %v62 = vrot.slane %v53, %v61
  %v63 = vlaneseq
  %v64 = vshrl.u32 %v63, 7
  %v65 = vsub.s32 2, %v64
  %v66 = vrot.slane %v53, %v65
  %v67 = vlaneseq
  %v68 = vshrl.u32 %v67, 7
  %v69 = vsub.s32 3, %v68
  %v70 = vrot.slane %v53, %v69
  %vm75 = vcmask 261120
  %v77 = vsel %vm75, %v29, 0
  %v80 = vsel %vm75, %v30, 0
  %v83 = vsel %vm75, %v31, 0
  %v86 = vsel %vm75, %v32, 0
  %v89 = vsel %vm75, %v33, 0
  %v92 = vsel %vm75, %v34, 0
  %v95 = vsel %vm75, %v35, 0
  %v98 = vsel %vm75, %v36, 0
  %100 = vmatprep.subr.mxu0 %v38
  %101 = vmatpush1.msra.mxu0 %v37
  %102 = vmatprep.subr.mxu0 %v42
  %103 = vmatpush1.msra.mxu0 %v41
  %104 = vmatprep.subr.mxu0 %v46
  %105 = vmatpush1.msra.mxu0 %v45
  %106 = vmatprep.subr.mxu0 %v50
  %107 = vmatpush1.msra.mxu0 %v49
  %108 = vmatprep.subr.mxu0 0.0
  %109 = vmatpush1.msra.mxu0 0.0
  %110 = vmatprep.subr.mxu0 0.0
  %111 = vmatpush1.msra.mxu0 0.0
  %112 = vmatprep.subr.mxu0 0.0
  %113 = vmatpush1.msra.mxu0 0.0
  %114 = vmatprep.subr.mxu0 0.0
  %115 = vmatpush1.msra.mxu0 0.0
  %116 = vmatprep.subr.mxu0 0.0
  %117 = vmatpush1.msra.mxu0 0.0
  %118 = vmatprep.subr.mxu0 0.0
  %119 = vmatpush1.msra.mxu0 0.0
  %120 = vmatprep.subr.mxu0 0.0
  %121 = vmatpush1.msra.mxu0 0.0
  %122 = vmatprep.subr.mxu0 0.0
  %123 = vmatpush1.msra.mxu0 0.0
  %124 = vmatprep.subr.mxu0 0.0
  %125 = vmatpush1.msra.mxu0 0.0
  %126 = vmatprep.subr.mxu0 0.0
  %127 = vmatpush1.msra.mxu0 0.0
  %128 = vmatprep.subr.mxu0 0.0
  %129 = vmatpush1.msra.mxu0 0.0
  %130 = vmatprep.subr.mxu0 0.0
  %131 = vmatpush1.msra.mxu0 0.0
  %132 = vmatprep.subr.mxu0 0.0
  %133 = vmatpush1.msra.mxu0 0.0
  %134 = vmatprep.subr.mxu0 0.0
  %135 = vmatpush1.msra.mxu0 0.0
  %136 = vmatprep.subr.mxu0 0.0
  %137 = vmatpush1.msra.mxu0 0.0
  %138 = vmatprep.subr.mxu0 0.0
  %139 = vmatpush1.msra.mxu0 0.0
  %140 = vmatprep.subr.mxu0 0.0
  %141 = vmatpush1.msra.mxu0 0.0
  %142 = vmatprep.subr.mxu0 0.0
  %143 = vmatpush1.msra.mxu0 0.0
  %144 = vmatprep.subr.mxu0 0.0
  %145 = vmatpush1.msra.mxu0 0.0
  %146 = vmatprep.subr.mxu0 0.0
  %147 = vmatpush1.msra.mxu0 0.0
  %148 = vmatprep.subr.mxu0 0.0
  %149 = vmatpush1.msra.mxu0 0.0
  %150 = vmatprep.subr.mxu0 0.0
  %151 = vmatpush1.msra.mxu0 0.0
  %152 = vmatprep.subr.mxu0 0.0
  %153 = vmatpush1.msra.mxu0 0.0
  %154 = vmatprep.subr.mxu0 0.0
  %155 = vmatpush1.msra.mxu0 0.0
  %156 = vmatprep.subr.mxu0 0.0
  %157 = vmatpush1.msra.mxu0 0.0
  %158 = vmatprep.subr.mxu0 0.0
  %159 = vmatpush1.msra.mxu0 0.0
  %160 = vmatprep.subr.mxu0 0.0
  %161 = vmatpush1.msra.mxu0 0.0
  %162 = vmatprep.subr.mxu0 0.0
  %163 = vmatpush1.msra.mxu0 0.0
  %164 = vmatprep.mubr.f32.mxu0 0.0
  %165 = vmatmul.mubr.f32.gmra.mrb[0].mxu0 %v77
  %v166 = vpop.f32.mrb[0].mxu0
  %v167 = vadd.f32 %v58, %v166
  %v168 = vpop.f32.mrb[0].mxu0
  %v169 = vadd.f32 %v62, %v168
  %170 = vmatprep.mubr.f32.mxu0 0.0
  %171 = vmatmul.mubr.f32.gmra.mrb[0].mxu0 %v80
  %v172 = vpop.f32.mrb[0].mxu0
  %v173 = vadd.f32 %v58, %v172
  %v174 = vpop.f32.mrb[0].mxu0
  %v175 = vadd.f32 %v62, %v174
  %176 = vmatprep.mubr.f32.mxu0 0.0
  %177 = vmatmul.mubr.f32.gmra.mrb[0].mxu0 %v83
  %v178 = vpop.f32.mrb[0].mxu0
  %v179 = vadd.f32 %v58, %v178
  %v180 = vpop.f32.mrb[0].mxu0
  %v181 = vadd.f32 %v62, %v180
  %182 = vmatprep.mubr.f32.mxu0 0.0
  %183 = vmatmul.mubr.f32.gmra.mrb[0].mxu0 %v86
  %v184 = vpop.f32.mrb[0].mxu0
  %v185 = vadd.f32 %v58, %v184
  %v186 = vpop.f32.mrb[0].mxu0
  %v187 = vadd.f32 %v62, %v186
  %188 = vmatprep.mubr.f32.mxu0 0.0
  %189 = vmatmul.mubr.f32.gmra.mrb[0].mxu0 %v89
  %v190 = vpop.f32.mrb[0].mxu0
  %v191 = vadd.f32 %v58, %v190
  %v192 = vpop.f32.mrb[0].mxu0
  %v193 = vadd.f32 %v62, %v192
  %194 = vmatprep.mubr.f32.mxu0 0.0
  %195 = vmatmul.mubr.f32.gmra.mrb[0].mxu0 %v92
  %v196 = vpop.f32.mrb[0].mxu0
  %v197 = vadd.f32 %v58, %v196
  %v198 = vpop.f32.mrb[0].mxu0
  %v199 = vadd.f32 %v62, %v198
  %200 = vmatprep.mubr.f32.mxu0 0.0
  %201 = vmatmul.mubr.f32.gmra.mrb[0].mxu0 %v95
  %v202 = vpop.f32.mrb[0].mxu0
  %v203 = vadd.f32 %v58, %v202
  %v204 = vpop.f32.mrb[0].mxu0
  %v205 = vadd.f32 %v62, %v204
  %206 = vmatprep.mubr.f32.mxu0 0.0
  %207 = vmatmul.mubr.f32.gmra.mrb[0].mxu0 %v98
  %v208 = vpop.f32.mrb[0].mxu0
  %v209 = vadd.f32 %v58, %v208
  %v210 = vpop.f32.mrb[0].mxu0
  %v211 = vadd.f32 %v62, %v210
  %212 = vdwg.mxu0
  %213 = vmatprep.subr.mxu0 %v40
  %214 = vmatpush1.msra.mxu0 %v39
  %215 = vmatprep.subr.mxu0 %v44
  %216 = vmatpush1.msra.mxu0 %v43
  %217 = vmatprep.subr.mxu0 %v48
  %218 = vmatpush1.msra.mxu0 %v47
  %219 = vmatprep.subr.mxu0 %v52
  %220 = vmatpush1.msra.mxu0 %v51
  %221 = vmatprep.subr.mxu0 0.0
  %222 = vmatpush1.msra.mxu0 0.0
  %223 = vmatprep.subr.mxu0 0.0
  %224 = vmatpush1.msra.mxu0 0.0
  %225 = vmatprep.subr.mxu0 0.0
  %226 = vmatpush1.msra.mxu0 0.0
  %227 = vmatprep.subr.mxu0 0.0
  %228 = vmatpush1.msra.mxu0 0.0
  %229 = vmatprep.subr.mxu0 0.0
  %230 = vmatpush1.msra.mxu0 0.0
  %231 = vmatprep.subr.mxu0 0.0
  %232 = vmatpush1.msra.mxu0 0.0
  %233 = vmatprep.subr.mxu0 0.0
  %234 = vmatpush1.msra.mxu0 0.0
  %235 = vmatprep.subr.mxu0 0.0
  %236 = vmatpush1.msra.mxu0 0.0
  %237 = vmatprep.subr.mxu0 0.0
  %238 = vmatpush1.msra.mxu0 0.0
  %239 = vmatprep.subr.mxu0 0.0
  %240 = vmatpush1.msra.mxu0 0.0
  %241 = vmatprep.subr.mxu0 0.0
  %242 = vmatpush1.msra.mxu0 0.0
  %243 = vmatprep.subr.mxu0 0.0
  %244 = vmatpush1.msra.mxu0 0.0
  %245 = vmatprep.subr.mxu0 0.0
  %246 = vmatpush1.msra.mxu0 0.0
  %247 = vmatprep.subr.mxu0 0.0
  %248 = vmatpush1.msra.mxu0 0.0
  %249 = vmatprep.subr.mxu0 0.0
  %250 = vmatpush1.msra.mxu0 0.0
  %251 = vmatprep.subr.mxu0 0.0
  %252 = vmatpush1.msra.mxu0 0.0
  %253 = vmatprep.subr.mxu0 0.0
  %254 = vmatpush1.msra.mxu0 0.0
  %255 = vmatprep.subr.mxu0 0.0
  %256 = vmatpush1.msra.mxu0 0.0
  %257 = vmatprep.subr.mxu0 0.0
  %258 = vmatpush1.msra.mxu0 0.0
  %259 = vmatprep.subr.mxu0 0.0
  %260 = vmatpush1.msra.mxu0 0.0
  %261 = vmatprep.subr.mxu0 0.0
  %262 = vmatpush1.msra.mxu0 0.0
  %263 = vmatprep.subr.mxu0 0.0
  %264 = vmatpush1.msra.mxu0 0.0
  %265 = vmatprep.subr.mxu0 0.0
  %266 = vmatpush1.msra.mxu0 0.0
  %267 = vmatprep.subr.mxu0 0.0
  %268 = vmatpush1.msra.mxu0 0.0
  %269 = vmatprep.subr.mxu0 0.0
  %270 = vmatpush1.msra.mxu0 0.0
  %271 = vmatprep.subr.mxu0 0.0
  %272 = vmatpush1.msra.mxu0 0.0
  %273 = vmatprep.subr.mxu0 0.0
  %274 = vmatpush1.msra.mxu0 0.0
  %275 = vmatprep.subr.mxu0 0.0
  %276 = vmatpush1.msra.mxu0 0.0
  %277 = vmatprep.mubr.f32.mxu0 0.0
  %278 = vmatmul.mubr.f32.gmra.mrb[0].mxu0 %v77
  %v279 = vpop.f32.mrb[0].mxu0
  %v280 = vadd.f32 %v66, %v279
  %v281 = vpop.f32.mrb[0].mxu0
  %v282 = vadd.f32 %v70, %v281
  %283 = vmatprep.mubr.f32.mxu0 0.0
  %284 = vmatmul.mubr.f32.gmra.mrb[0].mxu0 %v80
  %v285 = vpop.f32.mrb[0].mxu0
  %v286 = vadd.f32 %v66, %v285
  %v287 = vpop.f32.mrb[0].mxu0
  %v288 = vadd.f32 %v70, %v287
  %289 = vmatprep.mubr.f32.mxu0 0.0
  %290 = vmatmul.mubr.f32.gmra.mrb[0].mxu0 %v83
  %v291 = vpop.f32.mrb[0].mxu0
  %v292 = vadd.f32 %v66, %v291
  %v293 = vpop.f32.mrb[0].mxu0
  %v294 = vadd.f32 %v70, %v293
  %295 = vmatprep.mubr.f32.mxu0 0.0
  %296 = vmatmul.mubr.f32.gmra.mrb[0].mxu0 %v86
  %v297 = vpop.f32.mrb[0].mxu0
  %v298 = vadd.f32 %v66, %v297
  %v299 = vpop.f32.mrb[0].mxu0
  %v300 = vadd.f32 %v70, %v299
  %301 = vmatprep.mubr.f32.mxu0 0.0
  %302 = vmatmul.mubr.f32.gmra.mrb[0].mxu0 %v89
  %v303 = vpop.f32.mrb[0].mxu0
  %v304 = vadd.f32 %v66, %v303
  %v305 = vpop.f32.mrb[0].mxu0
  %v306 = vadd.f32 %v70, %v305
  %307 = vmatprep.mubr.f32.mxu0 0.0
  %308 = vmatmul.mubr.f32.gmra.mrb[0].mxu0 %v92
  %v309 = vpop.f32.mrb[0].mxu0
  %v310 = vadd.f32 %v66, %v309
  %v311 = vpop.f32.mrb[0].mxu0
  %v312 = vadd.f32 %v70, %v311
  %313 = vmatprep.mubr.f32.mxu0 0.0
  %314 = vmatmul.mubr.f32.gmra.mrb[0].mxu0 %v95
  %v315 = vpop.f32.mrb[0].mxu0
  %v316 = vadd.f32 %v66, %v315
  %v317 = vpop.f32.mrb[0].mxu0
  %v318 = vadd.f32 %v70, %v317
  %319 = vmatprep.mubr.f32.mxu0 0.0
  %320 = vmatmul.mubr.f32.gmra.mrb[0].mxu0 %v98
  %v321 = vpop.f32.mrb[0].mxu0
  %v322 = vadd.f32 %v66, %v321
  %v323 = vpop.f32.mrb[0].mxu0
  %v324 = vadd.f32 %v70, %v323
  %325 = vdwg.mxu0
  %326 = vst [vmem:[#allocation4] sm:$0xff] %v167
  %327 = vst [vmem:[#allocation4 + $0x8] sm:$0xff] %v169
  %328 = vst [vmem:[#allocation4 + $0x10] sm:$0xff] %v280
  %329 = vst [vmem:[#allocation4 + $0x18] sm:$0xff] %v282
  %330 = vst [vmem:[#allocation4 + $0x20] sm:$0xff] %v173
  %331 = vst [vmem:[#allocation4 + $0x28] sm:$0xff] %v175
  %332 = vst [vmem:[#allocation4 + $0x30] sm:$0xff] %v286
  %333 = vst [vmem:[#allocation4 + $0x38] sm:$0xff] %v288
  %334 = vst [vmem:[#allocation4 + $0x40] sm:$0xff] %v179
  %335 = vst [vmem:[#allocation4 + $0x48] sm:$0xff] %v181
  %336 = vst [vmem:[#allocation4 + $0x50] sm:$0xff] %v292
  %337 = vst [vmem:[#allocation4 + $0x58] sm:$0xff] %v294
  %338 = vst [vmem:[#allocation4 + $0x60] sm:$0xff] %v185
  %339 = vst [vmem:[#allocation4 + $0x68] sm:$0xff] %v187
  %340 = vst [vmem:[#allocation4 + $0x70] sm:$0xff] %v298
  %341 = vst [vmem:[#allocation4 + $0x78] sm:$0xff] %v300
  %342 = vst [vmem:[#allocation4 + $0x80] sm:$0xff] %v191
  %343 = vst [vmem:[#allocation4 + $0x88] sm:$0xff] %v193
  %344 = vst [vmem:[#allocation4 + $0x90] sm:$0xff] %v304
  %345 = vst [vmem:[#allocation4 + $0x98] sm:$0xff] %v306
  %346 = vst [vmem:[#allocation4 + $0xa0] sm:$0xff] %v197
  %347 = vst [vmem:[#allocation4 + $0xa8] sm:$0xff] %v199
  %348 = vst [vmem:[#allocation4 + $0xb0] sm:$0xff] %v310
  %349 = vst [vmem:[#allocation4 + $0xb8] sm:$0xff] %v312
  %350 = vst [vmem:[#allocation4 + $0xc0] sm:$0xff] %v203
  %351 = vst [vmem:[#allocation4 + $0xc8] sm:$0xff] %v205
  %352 = vst [vmem:[#allocation4 + $0xd0] sm:$0xff] %v316
  %353 = vst [vmem:[#allocation4 + $0xd8] sm:$0xff] %v318
  %354 = vst [vmem:[#allocation4 + $0xe0] sm:$0xff] %v209
  %355 = vst [vmem:[#allocation4 + $0xe8] sm:$0xff] %v211
  %356 = vst [vmem:[#allocation4 + $0xf0] sm:$0xff] %v322
  %357 = vst [vmem:[#allocation4 + $0xf8] sm:$0xff] %v324
  %v358 = vld [vmem:[%s2] sm:$0xff]
  %v359 = vld [vmem:[%s2 + $0x8] sm:$0xff]
  %v360 = vld [vmem:[%s2 + $0x10] sm:$0xff]
  %v361 = vld [vmem:[%s2 + $0x18] sm:$0xff]
  %v362 = vld [vmem:[%s2 + $0x20] sm:$0xff]
  %v363 = vld [vmem:[%s2 + $0x28] sm:$0xff]
  %v364 = vld [vmem:[%s2 + $0x30] sm:$0xff]
  %v365 = vld [vmem:[%s2 + $0x38] sm:$0xff]
  %v366 = vld [vmem:[%s2 + $0x40] sm:$0xff]
  %v367 = vld [vmem:[%s2 + $0x48] sm:$0xff]
  %v368 = vld [vmem:[%s2 + $0x50] sm:$0xff]
  %v369 = vld [vmem:[%s2 + $0x58] sm:$0xff]
  %v370 = vld [vmem:[%s2 + $0x60] sm:$0xff]
  %v371 = vld [vmem:[%s2 + $0x68] sm:$0xff]
  %v372 = vld [vmem:[%s2 + $0x70] sm:$0xff]
  %v373 = vld [vmem:[%s2 + $0x78] sm:$0xff]
  %v374 = vld [vmem:[%s2 + $0x80] sm:$0xff]
  %v375 = vld [vmem:[%s2 + $0x88] sm:$0xff]
  %v376 = vld [vmem:[%s2 + $0x90] sm:$0xff]
  %v377 = vld [vmem:[%s2 + $0x98] sm:$0xff]
  %v378 = vld [vmem:[%s2 + $0xa0] sm:$0xff]
  %v379 = vld [vmem:[%s2 + $0xa8] sm:$0xff]
  %v380 = vld [vmem:[%s2 + $0xb0] sm:$0xff]
  %v381 = vld [vmem:[%s2 + $0xb8] sm:$0xff]
  %v382 = vld [vmem:[%s2 + $0xc0] sm:$0xff]
  %v383 = vld [vmem:[%s2 + $0xc8] sm:$0xff]
  %v384 = vld [vmem:[%s2 + $0xd0] sm:$0xff]
  %v385 = vld [vmem:[%s2 + $0xd8] sm:$0xff]
  %v386 = vld [vmem:[%s2 + $0xe0] sm:$0xff]
  %v387 = vld [vmem:[%s2 + $0xe8] sm:$0xff]
  %v388 = vld [vmem:[%s2 + $0xf0] sm:$0xff]
  %v389 = vld [vmem:[%s2 + $0xf8] sm:$0xff]
  %v390 = vld [vmem:[%s2 + $0x100] sm:$0xff]
  %v391 = vld [vmem:[%s2 + $0x108] sm:$0xff]
  %v392 = vld [vmem:[%s2 + $0x110] sm:$0xff]
  %v393 = vld [vmem:[%s2 + $0x118] sm:$0xff]
  %v394 = vld [vmem:[%s2 + $0x120] sm:$0xff]
  %v395 = vld [vmem:[%s2 + $0x128] sm:$0xff]
  %v396 = vld [vmem:[%s2 + $0x130] sm:$0xff]
  %v397 = vld [vmem:[%s2 + $0x138] sm:$0xff]
  %v398 = vld [vmem:[%s2 + $0x140] sm:$0xff]
  %v399 = vld [vmem:[%s2 + $0x148] sm:$0xff]
  %v400 = vld [vmem:[%s2 + $0x150] sm:$0xff]
  %v401 = vld [vmem:[%s2 + $0x158] sm:$0xff]
  %v402 = vld [vmem:[%s2 + $0x160] sm:$0xff]
  %v403 = vld [vmem:[%s2 + $0x168] sm:$0xff]
  %v404 = vld [vmem:[%s2 + $0x170] sm:$0xff]
  %v405 = vld [vmem:[%s2 + $0x178] sm:$0xff]
  %v406 = vld [vmem:[%s2 + $0x180] sm:$0xff]
  %v407 = vld [vmem:[%s2 + $0x188] sm:$0xff]
  %v408 = vld [vmem:[%s2 + $0x190] sm:$0xff]
  %v409 = vld [vmem:[%s2 + $0x198] sm:$0xff]
  %v410 = vld [vmem:[%s2 + $0x1a0] sm:$0xff]
  %v411 = vld [vmem:[%s2 + $0x1a8] sm:$0xff]
  %v412 = vld [vmem:[%s2 + $0x1b0] sm:$0xff]
  %v413 = vld [vmem:[%s2 + $0x1b8] sm:$0xff]
  %v414 = vld [vmem:[%s2 + $0x1c0] sm:$0xff]
  %v415 = vld [vmem:[%s2 + $0x1c8] sm:$0xff]
  %v416 = vld [vmem:[%s2 + $0x1d0] sm:$0xff]
  %v417 = vld [vmem:[%s2 + $0x1d8] sm:$0xff]
  %v418 = vld [vmem:[%s2 + $0x1e0] sm:$0xff]
  %v419 = vld [vmem:[%s2 + $0x1e8] sm:$0xff]
  %v420 = vld [vmem:[%s2 + $0x1f0] sm:$0xff]
  %v421 = vld [vmem:[%s2 + $0x1f8] sm:$0xff]
  %v422 = vld [vmem:[#allocation2] sm:$0xff]
  %v423 = vld [vmem:[#allocation3] sm:$0xff]
  %s424 = smul.u32 0, 4
  %s425 = smul.addr %s424, 8
  %s426 = scalar_lea.vmem [#allocation4], %s425
  %v427 = vld [vmem:[%s426] sm:$0xff]
  %v428 = vld [vmem:[%s426 + $0x8] sm:$0xff]
  %v429 = vld [vmem:[%s426 + $0x10] sm:$0xff]
  %v430 = vld [vmem:[%s426 + $0x18] sm:$0xff]
  %431 = vmatprep.subr.mxu0 %v359
  %432 = vmatpush1.msra.mxu0 %v358
  %433 = vmatprep.subr.mxu0 %v363
  %434 = vmatpush1.msra.mxu0 %v362
  %435 = vmatprep.subr.mxu0 %v367
  %436 = vmatpush1.msra.mxu0 %v366
  %437 = vmatprep.subr.mxu0 %v371
  %438 = vmatpush1.msra.mxu0 %v370
  %439 = vmatprep.subr.mxu0 %v375
  %440 = vmatpush1.msra.mxu0 %v374
  %441 = vmatprep.subr.mxu0 %v379
  %442 = vmatpush1.msra.mxu0 %v378
  %443 = vmatprep.subr.mxu0 %v383
  %444 = vmatpush1.msra.mxu0 %v382
  %445 = vmatprep.subr.mxu0 %v387
  %446 = vmatpush1.msra.mxu0 %v386
  %447 = vmatprep.subr.mxu0 %v391
  %448 = vmatpush1.msra.mxu0 %v390
  %449 = vmatprep.subr.mxu0 %v395
  %450 = vmatpush1.msra.mxu0 %v394
  %451 = vmatprep.subr.mxu0 %v399
  %452 = vmatpush1.msra.mxu0 %v398
  %453 = vmatprep.subr.mxu0 %v403
  %454 = vmatpush1.msra.mxu0 %v402
  %455 = vmatprep.subr.mxu0 %v407
  %456 = vmatpush1.msra.mxu0 %v406
  %457 = vmatprep.subr.mxu0 %v411
  %458 = vmatpush1.msra.mxu0 %v410
  %459 = vmatprep.subr.mxu0 %v415
  %460 = vmatpush1.msra.mxu0 %v414
  %461 = vmatprep.subr.mxu0 %v419
  %462 = vmatpush1.msra.mxu0 %v418
  %463 = vmatprep.subr.mxu0 0.0
  %464 = vmatpush1.msra.mxu0 0.0
  %465 = vmatprep.subr.mxu0 0.0
  %466 = vmatpush1.msra.mxu0 0.0
  %467 = vmatprep.subr.mxu0 0.0
  %468 = vmatpush1.msra.mxu0 0.0
  %469 = vmatprep.subr.mxu0 0.0
  %470 = vmatpush1.msra.mxu0 0.0
  %471 = vmatprep.subr.mxu0 0.0
  %472 = vmatpush1.msra.mxu0 0.0
  %473 = vmatprep.subr.mxu0 0.0
  %474 = vmatpush1.msra.mxu0 0.0
  %475 = vmatprep.subr.mxu0 0.0
  %476 = vmatpush1.msra.mxu0 0.0
  %477 = vmatprep.subr.mxu0 0.0
  %478 = vmatpush1.msra.mxu0 0.0
  %479 = vmatprep.subr.mxu0 0.0
  %480 = vmatpush1.msra.mxu0 0.0
  %481 = vmatprep.subr.mxu0 0.0
  %482 = vmatpush1.msra.mxu0 0.0
  %483 = vmatprep.subr.mxu0 0.0
  %484 = vmatpush1.msra.mxu0 0.0
  %485 = vmatprep.subr.mxu0 0.0
  %486 = vmatpush1.msra.mxu0 0.0
  %487 = vmatprep.subr.mxu0 0.0
  %488 = vmatpush1.msra.mxu0 0.0
  %489 = vmatprep.subr.mxu0 0.0
  %490 = vmatpush1.msra.mxu0 0.0
  %491 = vmatprep.subr.mxu0 0.0
  %492 = vmatpush1.msra.mxu0 0.0
  %493 = vmatprep.subr.mxu0 0.0
  %494 = vmatpush1.msra.mxu0 0.0
  %495 = vmatprep.mubr.f32.mxu0 0.0
  %496 = vmatmul.mubr.f32.gmra.mrb[0].mxu0 %v422
  %v497 = vpop.f32.mrb[0].mxu0
  %v498 = vadd.f32 0.0, %v497
  %v499 = vpop.f32.mrb[0].mxu0
  %v500 = vadd.f32 0.0, %v499
  %501 = vdwg.mxu0
  %502 = vmatprep.subr.mxu0 %v361
  %503 = vmatpush1.msra.mxu0 %v360
  %504 = vmatprep.subr.mxu0 %v365
  %505 = vmatpush1.msra.mxu0 %v364
  %506 = vmatprep.subr.mxu0 %v369
  %507 = vmatpush1.msra.mxu0 %v368
  %508 = vmatprep.subr.mxu0 %v373
  %509 = vmatpush1.msra.mxu0 %v372
  %510 = vmatprep.subr.mxu0 %v377
  %511 = vmatpush1.msra.mxu0 %v376
  %512 = vmatprep.subr.mxu0 %v381
  %513 = vmatpush1.msra.mxu0 %v380
  %514 = vmatprep.subr.mxu0 %v385
  %515 = vmatpush1.msra.mxu0 %v384
  %516 = vmatprep.subr.mxu0 %v389
  %517 = vmatpush1.msra.mxu0 %v388
  %518 = vmatprep.subr.mxu0 %v393
  %519 = vmatpush1.msra.mxu0 %v392
  %520 = vmatprep.subr.mxu0 %v397
  %521 = vmatpush1.msra.mxu0 %v396
  %522 = vmatprep.subr.mxu0 %v401
  %523 = vmatpush1.msra.mxu0 %v400
  %524 = vmatprep.subr.mxu0 %v405
  %525 = vmatpush1.msra.mxu0 %v404
  %526 = vmatprep.subr.mxu0 %v409
  %527 = vmatpush1.msra.mxu0 %v408
  %528 = vmatprep.subr.mxu0 %v413
  %529 = vmatpush1.msra.mxu0 %v412
  %530 = vmatprep.subr.mxu0 %v417
  %531 = vmatpush1.msra.mxu0 %v416
  %532 = vmatprep.subr.mxu0 %v421
  %533 = vmatpush1.msra.mxu0 %v420
  %534 = vmatprep.subr.mxu0 0.0
  %535 = vmatpush1.msra.mxu0 0.0
  %536 = vmatprep.subr.mxu0 0.0
  %537 = vmatpush1.msra.mxu0 0.0
  %538 = vmatprep.subr.mxu0 0.0
  %539 = vmatpush1.msra.mxu0 0.0
  %540 = vmatprep.subr.mxu0 0.0
  %541 = vmatpush1.msra.mxu0 0.0
  %542 = vmatprep.subr.mxu0 0.0
  %543 = vmatpush1.msra.mxu0 0.0
  %544 = vmatprep.subr.mxu0 0.0
  %545 = vmatpush1.msra.mxu0 0.0
  %546 = vmatprep.subr.mxu0 0.0
  %547 = vmatpush1.msra.mxu0 0.0
  %548 = vmatprep.subr.mxu0 0.0
  %549 = vmatpush1.msra.mxu0 0.0
  %550 = vmatprep.subr.mxu0 0.0
  %551 = vmatpush1.msra.mxu0 0.0
  %552 = vmatprep.subr.mxu0 0.0
  %553 = vmatpush1.msra.mxu0 0.0
  %554 = vmatprep.subr.mxu0 0.0
  %555 = vmatpush1.msra.mxu0 0.0
  %556 = vmatprep.subr.mxu0 0.0
  %557 = vmatpush1.msra.mxu0 0.0
  %558 = vmatprep.subr.mxu0 0.0
  %559 = vmatpush1.msra.mxu0 0.0
  %560 = vmatprep.subr.mxu0 0.0
  %561 = vmatpush1.msra.mxu0 0.0
  %562 = vmatprep.subr.mxu0 0.0
  %563 = vmatpush1.msra.mxu0 0.0
  %564 = vmatprep.subr.mxu0 0.0
  %565 = vmatpush1.msra.mxu0 0.0
  %566 = vmatprep.mubr.f32.mxu0 0.0
  %567 = vmatmul.mubr.f32.gmra.mrb[0].mxu0 %v422
  %v568 = vpop.f32.mrb[0].mxu0
  %v569 = vadd.f32 0.0, %v568
  %v570 = vpop.f32.mrb[0].mxu0
  %v571 = vadd.f32 0.0, %v570
  %572 = vdwg.mxu0
  %v573 = vadd.f32 %v427, %v498
  %v574 = vadd.f32 %v428, %v500
  %v575 = vadd.f32 %v429, %v569
  %v576 = vadd.f32 %v430, %v571
  %v577 = vxor.u32 %v573, 2147483648
  %v578 = vmul.f32 %v577, 1.442695
  %v579 = vpow.pop %v578
  %v580 = vadd.f32 %v579, 1.0
  %v581 = vrcp.pop %v580
  %v582 = vmul.f32 1.0, %v581
  %v583 = vxor.u32 %v574, 2147483648
  %v584 = vmul.f32 %v583, 1.442695
  %v585 = vpow.pop %v584
  %v586 = vadd.f32 %v585, 1.0
  %v587 = vrcp.pop %v586
  %v588 = vmul.f32 1.0, %v587
  %v589 = vtanh.pop %v575
  %v590 = vxor.u32 %v576, 2147483648
  %v591 = vmul.f32 %v590, 1.442695
  %v592 = vpow.pop %v591
  %v593 = vadd.f32 %v592, 1.0
  %v594 = vrcp.pop %v593
  %v595 = vmul.f32 1.0, %v594
  %v596 = vmul.f32 %v588, %v423
  %v597 = vmul.f32 %v582, %v589
  %v598 = vadd.f32 %v596, %v597
  %v599 = vtanh.pop %v598
  %v600 = vmul.f32 %v595, %v599
  %s601 = smul.u32 1, 4
  %s602 = smul.addr %s601, 8
  %s603 = scalar_lea.vmem [#allocation4], %s602
  %v604 = vld [vmem:[%s603] sm:$0xff]
  %v605 = vld [vmem:[%s603 + $0x8] sm:$0xff]
  %v606 = vld [vmem:[%s603 + $0x10] sm:$0xff]
  %v607 = vld [vmem:[%s603 + $0x18] sm:$0xff]
  %608 = vmatprep.subr.mxu0 %v359
  %609 = vmatpush1.msra.mxu0 %v358
  %610 = vmatprep.subr.mxu0 %v363
  %611 = vmatpush1.msra.mxu0 %v362
  %612 = vmatprep.subr.mxu0 %v367
  %613 = vmatpush1.msra.mxu0 %v366
  %614 = vmatprep.subr.mxu0 %v371
  %615 = vmatpush1.msra.mxu0 %v370
  %616 = vmatprep.subr.mxu0 %v375
  %617 = vmatpush1.msra.mxu0 %v374
  %618 = vmatprep.subr.mxu0 %v379
  %619 = vmatpush1.msra.mxu0 %v378
  %620 = vmatprep.subr.mxu0 %v383
  %621 = vmatpush1.msra.mxu0 %v382
  %622 = vmatprep.subr.mxu0 %v387
  %623 = vmatpush1.msra.mxu0 %v386
  %624 = vmatprep.subr.mxu0 %v391
  %625 = vmatpush1.msra.mxu0 %v390
  %626 = vmatprep.subr.mxu0 %v395
  %627 = vmatpush1.msra.mxu0 %v394
  %628 = vmatprep.subr.mxu0 %v399
  %629 = vmatpush1.msra.mxu0 %v398
  %630 = vmatprep.subr.mxu0 %v403
  %631 = vmatpush1.msra.mxu0 %v402
  %632 = vmatprep.subr.mxu0 %v407
  %633 = vmatpush1.msra.mxu0 %v406
  %634 = vmatprep.subr.mxu0 %v411
  %635 = vmatpush1.msra.mxu0 %v410
  %636 = vmatprep.subr.mxu0 %v415
  %637 = vmatpush1.msra.mxu0 %v414
  %638 = vmatprep.subr.mxu0 %v419
  %639 = vmatpush1.msra.mxu0 %v418
  %640 = vmatprep.subr.mxu0 0.0
  %641 = vmatpush1.msra.mxu0 0.0
  %642 = vmatprep.subr.mxu0 0.0
  %643 = vmatpush1.msra.mxu0 0.0
  %644 = vmatprep.subr.mxu0 0.0
  %645 = vmatpush1.msra.mxu0 0.0
  %646 = vmatprep.subr.mxu0 0.0
  %647 = vmatpush1.msra.mxu0 0.0
  %648 = vmatprep.subr.mxu0 0.0
  %649 = vmatpush1.msra.mxu0 0.0
  %650 = vmatprep.subr.mxu0 0.0
  %651 = vmatpush1.msra.mxu0 0.0
  %652 = vmatprep.subr.mxu0 0.0
  %653 = vmatpush1.msra.mxu0 0.0
  %654 = vmatprep.subr.mxu0 0.0
  %655 = vmatpush1.msra.mxu0 0.0
  %656 = vmatprep.subr.mxu0 0.0
  %657 = vmatpush1.msra.mxu0 0.0
  %658 = vmatprep.subr.mxu0 0.0
  %659 = vmatpush1.msra.mxu0 0.0
  %660 = vmatprep.subr.mxu0 0.0
  %661 = vmatpush1.msra.mxu0 0.0
  %662 = vmatprep.subr.mxu0 0.0
  %663 = vmatpush1.msra.mxu0 0.0
  %664 = vmatprep.subr.mxu0 0.0
  %665 = vmatpush1.msra.mxu0 0.0
  %666 = vmatprep.subr.mxu0 0.0
  %667 = vmatpush1.msra.mxu0 0.0
  %668 = vmatprep.subr.mxu0 0.0
  %669 = vmatpush1.msra.mxu0 0.0
  %670 = vmatprep.subr.mxu0 0.0
  %671 = vmatpush1.msra.mxu0 0.0
  %672 = vmatprep.mubr.f32.mxu0 0.0
  %673 = vmatmul.mubr.f32.gmra.mrb[0].mxu0 %v600
  %v674 = vpop.f32.mrb[0].mxu0
  %v675 = vadd.f32 0.0, %v674
  %v676 = vpop.f32.mrb[0].mxu0
  %v677 = vadd.f32 0.0, %v676
  %678 = vdwg.mxu0
  %679 = vmatprep.subr.mxu0 %v361
  %680 = vmatpush1.msra.mxu0 %v360
  %681 = vmatprep.subr.mxu0 %v365
  %682 = vmatpush1.msra.mxu0 %v364
  %683 = vmatprep.subr.mxu0 %v369
  %684 = vmatpush1.msra.mxu0 %v368
  %685 = vmatprep.subr.mxu0 %v373
  %686 = vmatpush1.msra.mxu0 %v372
  %687 = vmatprep.subr.mxu0 %v377
  %688 = vmatpush1.msra.mxu0 %v376
  %689 = vmatprep.subr.mxu0 %v381
  %690 = vmatpush1.msra.mxu0 %v380
  %691 = vmatprep.subr.mxu0 %v385
  %692 = vmatpush1.msra.mxu0 %v384
  %693 = vmatprep.subr.mxu0 %v389
  %694 = vmatpush1.msra.mxu0 %v388
  %695 = vmatprep.subr.mxu0 %v393
  %696 = vmatpush1.msra.mxu0 %v392
  %697 = vmatprep.subr.mxu0 %v397
  %698 = vmatpush1.msra.mxu0 %v396
  %699 = vmatprep.subr.mxu0 %v401
  %700 = vmatpush1.msra.mxu0 %v400
  %701 = vmatprep.subr.mxu0 %v405
  %702 = vmatpush1.msra.mxu0 %v404
  %703 = vmatprep.subr.mxu0 %v409
  %704 = vmatpush1.msra.mxu0 %v408
  %705 = vmatprep.subr.mxu0 %v413
  %706 = vmatpush1.msra.mxu0 %v412
  %707 = vmatprep.subr.mxu0 %v417
  %708 = vmatpush1.msra.mxu0 %v416
  %709 = vmatprep.subr.mxu0 %v421
  %710 = vmatpush1.msra.mxu0 %v420
  %711 = vmatprep.subr.mxu0 0.0
  %712 = vmatpush1.msra.mxu0 0.0
  %713 = vmatprep.subr.mxu0 0.0
  %714 = vmatpush1.msra.mxu0 0.0
  %715 = vmatprep.subr.mxu0 0.0
  %716 = vmatpush1.msra.mxu0 0.0
  %717 = vmatprep.subr.mxu0 0.0
  %718 = vmatpush1.msra.mxu0 0.0
  %719 = vmatprep.subr.mxu0 0.0
  %720 = vmatpush1.msra.mxu0 0.0
  %721 = vmatprep.subr.mxu0 0.0
  %722 = vmatpush1.msra.mxu0 0.0
  %723 = vmatprep.subr.mxu0 0.0
  %724 = vmatpush1.msra.mxu0 0.0
  %725 = vmatprep.subr.mxu0 0.0
  %726 = vmatpush1.msra.mxu0 0.0
  %727 = vmatprep.subr.mxu0 0.0
  %728 = vmatpush1.msra.mxu0 0.0
  %729 = vmatprep.subr.mxu0 0.0
  %730 = vmatpush1.msra.mxu0 0.0
  %731 = vmatprep.subr.mxu0 0.0
  %732 = vmatpush1.msra.mxu0 0.0
  %733 = vmatprep.subr.mxu0 0.0
  %734 = vmatpush1.msra.mxu0 0.0
  %735 = vmatprep.subr.mxu0 0.0
  %736 = vmatpush1.msra.mxu0 0.0
  %737 = vmatprep.subr.mxu0 0.0
  %738 = vmatpush1.msra.mxu0 0.0
  %739 = vmatprep.subr.mxu0 0.0
  %740 = vmatpush1.msra.mxu0 0.0
  %741 = vmatprep.subr.mxu0 0.0
  %742 = vmatpush1.msra.mxu0 0.0
  %743 = vmatprep.mubr.f32.mxu0 0.0
  %744 = vmatmul.mubr.f32.gmra.mrb[0].mxu0 %v600
  %v745 = vpop.f32.mrb[0].mxu0
  %v746 = vadd.f32 0.0, %v745
  %v747 = vpop.f32.mrb[0].mxu0
  %v748 = vadd.f32 0.0, %v747
  %749 = vdwg.mxu0
  %v750 = vadd.f32 %v604, %v675
  %v751 = vadd.f32 %v605, %v677
  %v752 = vadd.f32 %v606, %v746
  %v753 = vadd.f32 %v607, %v748
  %v754 = vxor.u32 %v750, 2147483648
  %v755 = vmul.f32 %v754, 1.442695
  %v756 = vpow.pop %v755
  %v757 = vadd.f32 %v756, 1.0
  %v758 = vrcp.pop %v757
  %v759 = vmul.f32 1.0, %v758
  %v760 = vxor.u32 %v751, 2147483648
  %v761 = vmul.f32 %v760, 1.442695
  %v762 = vpow.pop %v761
  %v763 = vadd.f32 %v762, 1.0
  %v764 = vrcp.pop %v763
  %v765 = vmul.f32 1.0, %v764
  %v766 = vtanh.pop %v752
  %v767 = vxor.u32 %v753, 2147483648
  %v768 = vmul.f32 %v767, 1.442695
  %v769 = vpow.pop %v768
  %v770 = vadd.f32 %v769, 1.0
  %v771 = vrcp.pop %v770
  %v772 = vmul.f32 1.0, %v771
  %v773 = vmul.f32 %v765, %v598
  %v774 = vmul.f32 %v759, %v766
  %v775 = vadd.f32 %v773, %v774
  %v776 = vtanh.pop %v775
  %v777 = vmul.f32 %v772, %v776
  %s778 = smul.u32 2, 4
  %s779 = smul.addr %s778, 8
  %s780 = scalar_lea.vmem [#allocation4], %s779
  %v781 = vld [vmem:[%s780] sm:$0xff]
  %v782 = vld [vmem:[%s780 + $0x8] sm:$0xff]
  %v783 = vld [vmem:[%s780 + $0x10] sm:$0xff]
  %v784 = vld [vmem:[%s780 + $0x18] sm:$0xff]
  %785 = vmatprep.subr.mxu0 %v359
  %786 = vmatpush1.msra.mxu0 %v358
  %787 = vmatprep.subr.mxu0 %v363
  %788 = vmatpush1.msra.mxu0 %v362
  %789 = vmatprep.subr.mxu0 %v367
  %790 = vmatpush1.msra.mxu0 %v366
  %791 = vmatprep.subr.mxu0 %v371
  %792 = vmatpush1.msra.mxu0 %v370
  %793 = vmatprep.subr.mxu0 %v375
  %794 = vmatpush1.msra.mxu0 %v374
  %795 = vmatprep.subr.mxu0 %v379
  %796 = vmatpush1.msra.mxu0 %v378
  %797 = vmatprep.subr.mxu0 %v383
  %798 = vmatpush1.msra.mxu0 %v382
  %799 = vmatprep.subr.mxu0 %v387
  %800 = vmatpush1.msra.mxu0 %v386
  %801 = vmatprep.subr.mxu0 %v391
  %802 = vmatpush1.msra.mxu0 %v390
  %803 = vmatprep.subr.mxu0 %v395
  %804 = vmatpush1.msra.mxu0 %v394
  %805 = vmatprep.subr.mxu0 %v399
  %806 = vmatpush1.msra.mxu0 %v398
  %807 = vmatprep.subr.mxu0 %v403
  %808 = vmatpush1.msra.mxu0 %v402
  %809 = vmatprep.subr.mxu0 %v407
  %810 = vmatpush1.msra.mxu0 %v406
  %811 = vmatprep.subr.mxu0 %v411
  %812 = vmatpush1.msra.mxu0 %v410
  %813 = vmatprep.subr.mxu0 %v415
  %814 = vmatpush1.msra.mxu0 %v414
  %815 = vmatprep.subr.mxu0 %v419
  %816 = vmatpush1.msra.mxu0 %v418
  %817 = vmatprep.subr.mxu0 0.0
  %818 = vmatpush1.msra.mxu0 0.0
  %819 = vmatprep.subr.mxu0 0.0
  %820 = vmatpush1.msra.mxu0 0.0
  %821 = vmatprep.subr.mxu0 0.0
  %822 = vmatpush1.msra.mxu0 0.0
  %823 = vmatprep.subr.mxu0 0.0
  %824 = vmatpush1.msra.mxu0 0.0
  %825 = vmatprep.subr.mxu0 0.0
  %826 = vmatpush1.msra.mxu0 0.0
  %827 = vmatprep.subr.mxu0 0.0
  %828 = vmatpush1.msra.mxu0 0.0
  %829 = vmatprep.subr.mxu0 0.0
  %830 = vmatpush1.msra.mxu0 0.0
  %831 = vmatprep.subr.mxu0 0.0
  %832 = vmatpush1.msra.mxu0 0.0
  %833 = vmatprep.subr.mxu0 0.0
  %834 = vmatpush1.msra.mxu0 0.0
  %835 = vmatprep.subr.mxu0 0.0
  %836 = vmatpush1.msra.mxu0 0.0
  %837 = vmatprep.subr.mxu0 0.0
  %838 = vmatpush1.msra.mxu0 0.0
  %839 = vmatprep.subr.mxu0 0.0
  %840 = vmatpush1.msra.mxu0 0.0
  %841 = vmatprep.subr.mxu0 0.0
  %842 = vmatpush1.msra.mxu0 0.0
  %843 = vmatprep.subr.mxu0 0.0
  %844 = vmatpush1.msra.mxu0 0.0
  %845 = vmatprep.subr.mxu0 0.0
  %846 = vmatpush1.msra.mxu0 0.0
  %847 = vmatprep.subr.mxu0 0.0
  %848 = vmatpush1.msra.mxu0 0.0
  %849 = vmatprep.mubr.f32.mxu0 0.0
  %850 = vmatmul.mubr.f32.gmra.mrb[0].mxu0 %v777
  %v851 = vpop.f32.mrb[0].mxu0
  %v852 = vadd.f32 0.0, %v851
  %v853 = vpop.f32.mrb[0].mxu0
  %v854 = vadd.f32 0.0, %v853
  %855 = vdwg.mxu0
  %856 = vmatprep.subr.mxu0 %v361
  %857 = vmatpush1.msra.mxu0 %v360
  %858 = vmatprep.subr.mxu0 %v365
  %859 = vmatpush1.msra.mxu0 %v364
  %860 = vmatprep.subr.mxu0 %v369
  %861 = vmatpush1.msra.mxu0 %v368
  %862 = vmatprep.subr.mxu0 %v373
  %863 = vmatpush1.msra.mxu0 %v372
  %864 = vmatprep.subr.mxu0 %v377
  %865 = vmatpush1.msra.mxu0 %v376
  %866 = vmatprep.subr.mxu0 %v381
  %867 = vmatpush1.msra.mxu0 %v380
  %868 = vmatprep.subr.mxu0 %v385
  %869 = vmatpush1.msra.mxu0 %v384
  %870 = vmatprep.subr.mxu0 %v389
  %871 = vmatpush1.msra.mxu0 %v388
  %872 = vmatprep.subr.mxu0 %v393
  %873 = vmatpush1.msra.mxu0 %v392
  %874 = vmatprep.subr.mxu0 %v397
  %875 = vmatpush1.msra.mxu0 %v396
  %876 = vmatprep.subr.mxu0 %v401
  %877 = vmatpush1.msra.mxu0 %v400
  %878 = vmatprep.subr.mxu0 %v405
  %879 = vmatpush1.msra.mxu0 %v404
  %880 = vmatprep.subr.mxu0 %v409
  %881 = vmatpush1.msra.mxu0 %v408
  %882 = vmatprep.subr.mxu0 %v413
  %883 = vmatpush1.msra.mxu0 %v412
  %884 = vmatprep.subr.mxu0 %v417
  %885 = vmatpush1.msra.mxu0 %v416
  %886 = vmatprep.subr.mxu0 %v421
  %887 = vmatpush1.msra.mxu0 %v420
  %888 = vmatprep.subr.mxu0 0.0
  %889 = vmatpush1.msra.mxu0 0.0
  %890 = vmatprep.subr.mxu0 0.0
  %891 = vmatpush1.msra.mxu0 0.0
  %892 = vmatprep.subr.mxu0 0.0
  %893 = vmatpush1.msra.mxu0 0.0
  %894 = vmatprep.subr.mxu0 0.0
  %895 = vmatpush1.msra.mxu0 0.0
  %896 = vmatprep.subr.mxu0 0.0
  %897 = vmatpush1.msra.mxu0 0.0
  %898 = vmatprep.subr.mxu0 0.0
  %899 = vmatpush1.msra.mxu0 0.0
  %900 = vmatprep.subr.mxu0 0.0
  %901 = vmatpush1.msra.mxu0 0.0
  %902 = vmatprep.subr.mxu0 0.0
  %903 = vmatpush1.msra.mxu0 0.0
  %904 = vmatprep.subr.mxu0 0.0
  %905 = vmatpush1.msra.mxu0 0.0
  %906 = vmatprep.subr.mxu0 0.0
  %907 = vmatpush1.msra.mxu0 0.0
  %908 = vmatprep.subr.mxu0 0.0
  %909 = vmatpush1.msra.mxu0 0.0
  %910 = vmatprep.subr.mxu0 0.0
  %911 = vmatpush1.msra.mxu0 0.0
  %912 = vmatprep.subr.mxu0 0.0
  %913 = vmatpush1.msra.mxu0 0.0
  %914 = vmatprep.subr.mxu0 0.0
  %915 = vmatpush1.msra.mxu0 0.0
  %916 = vmatprep.subr.mxu0 0.0
  %917 = vmatpush1.msra.mxu0 0.0
  %918 = vmatprep.subr.mxu0 0.0
  %919 = vmatpush1.msra.mxu0 0.0
  %920 = vmatprep.mubr.f32.mxu0 0.0
  %921 = vmatmul.mubr.f32.gmra.mrb[0].mxu0 %v777
  %v922 = vpop.f32.mrb[0].mxu0
  %v923 = vadd.f32 0.0, %v922
  %v924 = vpop.f32.mrb[0].mxu0
  %v925 = vadd.f32 0.0, %v924
  %926 = vdwg.mxu0
  %v927 = vadd.f32 %v781, %v852
  %v928 = vadd.f32 %v782, %v854
  %v929 = vadd.f32 %v783, %v923
  %v930 = vadd.f32 %v784, %v925
  %v931 = vxor.u32 %v927, 2147483648
  %v932 = vmul.f32 %v931, 1.442695
  %v933 = vpow.pop %v932
  %v934 = vadd.f32 %v933, 1.0
  %v935 = vrcp.pop %v934
  %v936 = vmul.f32 1.0, %v935
  %v937 = vxor.u32 %v928, 2147483648
  %v938 = vmul.f32 %v937, 1.442695
  %v939 = vpow.pop %v938
  %v940 = vadd.f32 %v939, 1.0
  %v941 = vrcp.pop %v940
  %v942 = vmul.f32 1.0, %v941
  %v943 = vtanh.pop %v929
  %v944 = vxor.u32 %v930, 2147483648
  %v945 = vmul.f32 %v944, 1.442695
  %v946 = vpow.pop %v945
  %v947 = vadd.f32 %v946, 1.0
  %v948 = vrcp.pop %v947
  %v949 = vmul.f32 1.0, %v948
  %v950 = vmul.f32 %v942, %v775
  %v951 = vmul.f32 %v936, %v943
  %v952 = vadd.f32 %v950, %v951
  %v953 = vtanh.pop %v952
  %v954 = vmul.f32 %v949, %v953
  %s955 = smul.u32 3, 4
  %s956 = smul.addr %s955, 8
  %s957 = scalar_lea.vmem [#allocation4], %s956
  %v958 = vld [vmem:[%s957] sm:$0xff]
  %v959 = vld [vmem:[%s957 + $0x8] sm:$0xff]
  %v960 = vld [vmem:[%s957 + $0x10] sm:$0xff]
  %v961 = vld [vmem:[%s957 + $0x18] sm:$0xff]
  %962 = vmatprep.subr.mxu0 %v359
  %963 = vmatpush1.msra.mxu0 %v358
  %964 = vmatprep.subr.mxu0 %v363
  %965 = vmatpush1.msra.mxu0 %v362
  %966 = vmatprep.subr.mxu0 %v367
  %967 = vmatpush1.msra.mxu0 %v366
  %968 = vmatprep.subr.mxu0 %v371
  %969 = vmatpush1.msra.mxu0 %v370
  %970 = vmatprep.subr.mxu0 %v375
  %971 = vmatpush1.msra.mxu0 %v374
  %972 = vmatprep.subr.mxu0 %v379
  %973 = vmatpush1.msra.mxu0 %v378
  %974 = vmatprep.subr.mxu0 %v383
  %975 = vmatpush1.msra.mxu0 %v382
  %976 = vmatprep.subr.mxu0 %v387
  %977 = vmatpush1.msra.mxu0 %v386
  %978 = vmatprep.subr.mxu0 %v391
  %979 = vmatpush1.msra.mxu0 %v390
  %980 = vmatprep.subr.mxu0 %v395
  %981 = vmatpush1.msra.mxu0 %v394
  %982 = vmatprep.subr.mxu0 %v399
  %983 = vmatpush1.msra.mxu0 %v398
  %984 = vmatprep.subr.mxu0 %v403
  %985 = vmatpush1.msra.mxu0 %v402
  %986 = vmatprep.subr.mxu0 %v407
  %987 = vmatpush1.msra.mxu0 %v406
  %988 = vmatprep.subr.mxu0 %v411
  %989 = vmatpush1.msra.mxu0 %v410
  %990 = vmatprep.subr.mxu0 %v415
  %991 = vmatpush1.msra.mxu0 %v414
  %992 = vmatprep.subr.mxu0 %v419
  %993 = vmatpush1.msra.mxu0 %v418
  %994 = vmatprep.subr.mxu0 0.0
  %995 = vmatpush1.msra.mxu0 0.0
  %996 = vmatprep.subr.mxu0 0.0
  %997 = vmatpush1.msra.mxu0 0.0
  %998 = vmatprep.subr.mxu0 0.0
  %999 = vmatpush1.msra.mxu0 0.0
  %1000 = vmatprep.subr.mxu0 0.0
  %1001 = vmatpush1.msra.mxu0 0.0
  %1002 = vmatprep.subr.mxu0 0.0
  %1003 = vmatpush1.msra.mxu0 0.0
  %1004 = vmatprep.subr.mxu0 0.0
  %1005 = vmatpush1.msra.mxu0 0.0
  %1006 = vmatprep.subr.mxu0 0.0
  %1007 = vmatpush1.msra.mxu0 0.0
  %1008 = vmatprep.subr.mxu0 0.0
  %1009 = vmatpush1.msra.mxu0 0.0
  %1010 = vmatprep.subr.mxu0 0.0
  %1011 = vmatpush1.msra.mxu0 0.0
  %1012 = vmatprep.subr.mxu0 0.0
  %1013 = vmatpush1.msra.mxu0 0.0
  %1014 = vmatprep.subr.mxu0 0.0
  %1015 = vmatpush1.msra.mxu0 0.0
  %1016 = vmatprep.subr.mxu0 0.0
  %1017 = vmatpush1.msra.mxu0 0.0
  %1018 = vmatprep.subr.mxu0 0.0
  %1019 = vmatpush1.msra.mxu0 0.0
  %1020 = vmatprep.subr.mxu0 0.0
  %1021 = vmatpush1.msra.mxu0 0.0
  %1022 = vmatprep.subr.mxu0 0.0
  %1023 = vmatpush1.msra.mxu0 0.0
  %1024 = vmatprep.subr.mxu0 0.0
  %1025 = vmatpush1.msra.mxu0 0.0
  %1026 = vmatprep.mubr.f32.mxu0 0.0
  %1027 = vmatmul.mubr.f32.gmra.mrb[0].mxu0 %v954
  %v1028 = vpop.f32.mrb[0].mxu0
  %v1029 = vadd.f32 0.0, %v1028
  %v1030 = vpop.f32.mrb[0].mxu0
  %v1031 = vadd.f32 0.0, %v1030
  %1032 = vdwg.mxu0
  %1033 = vmatprep.subr.mxu0 %v361
  %1034 = vmatpush1.msra.mxu0 %v360
  %1035 = vmatprep.subr.mxu0 %v365
  %1036 = vmatpush1.msra.mxu0 %v364
  %1037 = vmatprep.subr.mxu0 %v369
  %1038 = vmatpush1.msra.mxu0 %v368
  %1039 = vmatprep.subr.mxu0 %v373
  %1040 = vmatpush1.msra.mxu0 %v372
  %1041 = vmatprep.subr.mxu0 %v377
  %1042 = vmatpush1.msra.mxu0 %v376
  %1043 = vmatprep.subr.mxu0 %v381
  %1044 = vmatpush1.msra.mxu0 %v380
  %1045 = vmatprep.subr.mxu0 %v385
  %1046 = vmatpush1.msra.mxu0 %v384
  %1047 = vmatprep.subr.mxu0 %v389
  %1048 = vmatpush1.msra.mxu0 %v388
  %1049 = vmatprep.subr.mxu0 %v393
  %1050 = vmatpush1.msra.mxu0 %v392
  %1051 = vmatprep.subr.mxu0 %v397
  %1052 = vmatpush1.msra.mxu0 %v396
  %1053 = vmatprep.subr.mxu0 %v401
  %1054 = vmatpush1.msra.mxu0 %v400
  %1055 = vmatprep.subr.mxu0 %v405
  %1056 = vmatpush1.msra.mxu0 %v404
  %1057 = vmatprep.subr.mxu0 %v409
  %1058 = vmatpush1.msra.mxu0 %v408
  %1059 = vmatprep.subr.mxu0 %v413
  %1060 = vmatpush1.msra.mxu0 %v412
  %1061 = vmatprep.subr.mxu0 %v417
  %1062 = vmatpush1.msra.mxu0 %v416
  %1063 = vmatprep.subr.mxu0 %v421
  %1064 = vmatpush1.msra.mxu0 %v420
  %1065 = vmatprep.subr.mxu0 0.0
  %1066 = vmatpush1.msra.mxu0 0.0
  %1067 = vmatprep.subr.mxu0 0.0
  %1068 = vmatpush1.msra.mxu0 0.0
  %1069 = vmatprep.subr.mxu0 0.0
  %1070 = vmatpush1.msra.mxu0 0.0
  %1071 = vmatprep.subr.mxu0 0.0
  %1072 = vmatpush1.msra.mxu0 0.0
  %1073 = vmatprep.subr.mxu0 0.0
  %1074 = vmatpush1.msra.mxu0 0.0
  %1075 = vmatprep.subr.mxu0 0.0
  %1076 = vmatpush1.msra.mxu0 0.0
  %1077 = vmatprep.subr.mxu0 0.0
  %1078 = vmatpush1.msra.mxu0 0.0
  %1079 = vmatprep.subr.mxu0 0.0
  %1080 = vmatpush1.msra.mxu0 0.0
  %1081 = vmatprep.subr.mxu0 0.0
  %1082 = vmatpush1.msra.mxu0 0.0
  %1083 = vmatprep.subr.mxu0 0.0
  %1084 = vmatpush1.msra.mxu0 0.0
  %1085 = vmatprep.subr.mxu0 0.0
  %1086 = vmatpush1.msra.mxu0 0.0
  %1087 = vmatprep.subr.mxu0 0.0
  %1088 = vmatpush1.msra.mxu0 0.0
  %1089 = vmatprep.subr.mxu0 0.0
  %1090 = vmatpush1.msra.mxu0 0.0
  %1091 = vmatprep.subr.mxu0 0.0
  %1092 = vmatpush1.msra.mxu0 0.0
  %1093 = vmatprep.subr.mxu0 0.0
  %1094 = vmatpush1.msra.mxu0 0.0
  %1095 = vmatprep.subr.mxu0 0.0
  %1096 = vmatpush1.msra.mxu0 0.0
  %1097 = vmatprep.mubr.f32.mxu0 0.0
  %1098 = vmatmul.mubr.f32.gmra.mrb[0].mxu0 %v954
  %v1099 = vpop.f32.mrb[0].mxu0
  %v1100 = vadd.f32 0.0, %v1099
  %v1101 = vpop.f32.mrb[0].mxu0
  %v1102 = vadd.f32 0.0, %v1101
  %1103 = vdwg.mxu0
  %v1104 = vadd.f32 %v958, %v1029
  %v1105 = vadd.f32 %v959, %v1031
  %v1106 = vadd.f32 %v960, %v1100
  %v1107 = vadd.f32 %v961, %v1102
  %v1108 = vxor.u32 %v1104, 2147483648
  %v1109 = vmul.f32 %v1108, 1.442695
  %v1110 = vpow.pop %v1109
  %v1111 = vadd.f32 %v1110, 1.0
  %v1112 = vrcp.pop %v1111
  %v1113 = vmul.f32 1.0, %v1112
  %v1114 = vxor.u32 %v1105, 2147483648
  %v1115 = vmul.f32 %v1114, 1.442695
  %v1116 = vpow.pop %v1115
  %v1117 = vadd.f32 %v1116, 1.0
  %v1118 = vrcp.pop %v1117
  %v1119 = vmul.f32 1.0, %v1118
  %v1120 = vtanh.pop %v1106
  %v1121 = vxor.u32 %v1107, 2147483648
  %v1122 = vmul.f32 %v1121, 1.442695
  %v1123 = vpow.pop %v1122
  %v1124 = vadd.f32 %v1123, 1.0
  %v1125 = vrcp.pop %v1124
  %v1126 = vmul.f32 1.0, %v1125
  %v1127 = vmul.f32 %v1119, %v952
  %v1128 = vmul.f32 %v1113, %v1120
  %v1129 = vadd.f32 %v1127, %v1128
  %v1130 = vtanh.pop %v1129
  %v1131 = vmul.f32 %v1126, %v1130
  %s1132 = smul.u32 4, 4
  %s1133 = smul.addr %s1132, 8
  %s1134 = scalar_lea.vmem [#allocation4], %s1133
  %v1135 = vld [vmem:[%s1134] sm:$0xff]
  %v1136 = vld [vmem:[%s1134 + $0x8] sm:$0xff]
  %v1137 = vld [vmem:[%s1134 + $0x10] sm:$0xff]
  %v1138 = vld [vmem:[%s1134 + $0x18] sm:$0xff]
  %1139 = vmatprep.subr.mxu0 %v359
  %1140 = vmatpush1.msra.mxu0 %v358
  %1141 = vmatprep.subr.mxu0 %v363
  %1142 = vmatpush1.msra.mxu0 %v362
  %1143 = vmatprep.subr.mxu0 %v367
  %1144 = vmatpush1.msra.mxu0 %v366
  %1145 = vmatprep.subr.mxu0 %v371
  %1146 = vmatpush1.msra.mxu0 %v370
  %1147 = vmatprep.subr.mxu0 %v375
  %1148 = vmatpush1.msra.mxu0 %v374
  %1149 = vmatprep.subr.mxu0 %v379
  %1150 = vmatpush1.msra.mxu0 %v378
  %1151 = vmatprep.subr.mxu0 %v383
  %1152 = vmatpush1.msra.mxu0 %v382
  %1153 = vmatprep.subr.mxu0 %v387
  %1154 = vmatpush1.msra.mxu0 %v386
  %1155 = vmatprep.subr.mxu0 %v391
  %1156 = vmatpush1.msra.mxu0 %v390
  %1157 = vmatprep.subr.mxu0 %v395
  %1158 = vmatpush1.msra.mxu0 %v394
  %1159 = vmatprep.subr.mxu0 %v399
  %1160 = vmatpush1.msra.mxu0 %v398
  %1161 = vmatprep.subr.mxu0 %v403
  %1162 = vmatpush1.msra.mxu0 %v402
  %1163 = vmatprep.subr.mxu0 %v407
  %1164 = vmatpush1.msra.mxu0 %v406
  %1165 = vmatprep.subr.mxu0 %v411
  %1166 = vmatpush1.msra.mxu0 %v410
  %1167 = vmatprep.subr.mxu0 %v415
  %1168 = vmatpush1.msra.mxu0 %v414
  %1169 = vmatprep.subr.mxu0 %v419
  %1170 = vmatpush1.msra.mxu0 %v418
  %1171 = vmatprep.subr.mxu0 0.0
  %1172 = vmatpush1.msra.mxu0 0.0
  %1173 = vmatprep.subr.mxu0 0.0
  %1174 = vmatpush1.msra.mxu0 0.0
  %1175 = vmatprep.subr.mxu0 0.0
  %1176 = vmatpush1.msra.mxu0 0.0
  %1177 = vmatprep.subr.mxu0 0.0
  %1178 = vmatpush1.msra.mxu0 0.0
  %1179 = vmatprep.subr.mxu0 0.0
  %1180 = vmatpush1.msra.mxu0 0.0
  %1181 = vmatprep.subr.mxu0 0.0
  %1182 = vmatpush1.msra.mxu0 0.0
  %1183 = vmatprep.subr.mxu0 0.0
  %1184 = vmatpush1.msra.mxu0 0.0
  %1185 = vmatprep.subr.mxu0 0.0
  %1186 = vmatpush1.msra.mxu0 0.0
  %1187 = vmatprep.subr.mxu0 0.0
  %1188 = vmatpush1.msra.mxu0 0.0
  %1189 = vmatprep.subr.mxu0 0.0
  %1190 = vmatpush1.msra.mxu0 0.0
  %1191 = vmatprep.subr.mxu0 0.0
  %1192 = vmatpush1.msra.mxu0 0.0
  %1193 = vmatprep.subr.mxu0 0.0
  %1194 = vmatpush1.msra.mxu0 0.0
  %1195 = vmatprep.subr.mxu0 0.0
  %1196 = vmatpush1.msra.mxu0 0.0
  %1197 = vmatprep.subr.mxu0 0.0
  %1198 = vmatpush1.msra.mxu0 0.0
  %1199 = vmatprep.subr.mxu0 0.0
  %1200 = vmatpush1.msra.mxu0 0.0
  %1201 = vmatprep.subr.mxu0 0.0
  %1202 = vmatpush1.msra.mxu0 0.0
  %1203 = vmatprep.mubr.f32.mxu0 0.0
  %1204 = vmatmul.mubr.f32.gmra.mrb[0].mxu0 %v1131
  %v1205 = vpop.f32.mrb[0].mxu0
  %v1206 = vadd.f32 0.0, %v1205
  %v1207 = vpop.f32.mrb[0].mxu0
  %v1208 = vadd.f32 0.0, %v1207
  %1209 = vdwg.mxu0
  %1210 = vmatprep.subr.mxu0 %v361
  %1211 = vmatpush1.msra.mxu0 %v360
  %1212 = vmatprep.subr.mxu0 %v365
  %1213 = vmatpush1.msra.mxu0 %v364
  %1214 = vmatprep.subr.mxu0 %v369
  %1215 = vmatpush1.msra.mxu0 %v368
  %1216 = vmatprep.subr.mxu0 %v373
  %1217 = vmatpush1.msra.mxu0 %v372
  %1218 = vmatprep.subr.mxu0 %v377
  %1219 = vmatpush1.msra.mxu0 %v376
  %1220 = vmatprep.subr.mxu0 %v381
  %1221 = vmatpush1.msra.mxu0 %v380
  %1222 = vmatprep.subr.mxu0 %v385
  %1223 = vmatpush1.msra.mxu0 %v384
  %1224 = vmatprep.subr.mxu0 %v389
  %1225 = vmatpush1.msra.mxu0 %v388
  %1226 = vmatprep.subr.mxu0 %v393
  %1227 = vmatpush1.msra.mxu0 %v392
  %1228 = vmatprep.subr.mxu0 %v397
  %1229 = vmatpush1.msra.mxu0 %v396
  %1230 = vmatprep.subr.mxu0 %v401
  %1231 = vmatpush1.msra.mxu0 %v400
  %1232 = vmatprep.subr.mxu0 %v405
  %1233 = vmatpush1.msra.mxu0 %v404
  %1234 = vmatprep.subr.mxu0 %v409
  %1235 = vmatpush1.msra.mxu0 %v408
  %1236 = vmatprep.subr.mxu0 %v413
  %1237 = vmatpush1.msra.mxu0 %v412
  %1238 = vmatprep.subr.mxu0 %v417
  %1239 = vmatpush1.msra.mxu0 %v416
  %1240 = vmatprep.subr.mxu0 %v421
  %1241 = vmatpush1.msra.mxu0 %v420
  %1242 = vmatprep.subr.mxu0 0.0
  %1243 = vmatpush1.msra.mxu0 0.0
  %1244 = vmatprep.subr.mxu0 0.0
  %1245 = vmatpush1.msra.mxu0 0.0
  %1246 = vmatprep.subr.mxu0 0.0
  %1247 = vmatpush1.msra.mxu0 0.0
  %1248 = vmatprep.subr.mxu0 0.0
  %1249 = vmatpush1.msra.mxu0 0.0
  %1250 = vmatprep.subr.mxu0 0.0
  %1251 = vmatpush1.msra.mxu0 0.0
  %1252 = vmatprep.subr.mxu0 0.0
  %1253 = vmatpush1.msra.mxu0 0.0
  %1254 = vmatprep.subr.mxu0 0.0
  %1255 = vmatpush1.msra.mxu0 0.0
  %1256 = vmatprep.subr.mxu0 0.0
  %1257 = vmatpush1.msra.mxu0 0.0
  %1258 = vmatprep.subr.mxu0 0.0
  %1259 = vmatpush1.msra.mxu0 0.0
  %1260 = vmatprep.subr.mxu0 0.0
  %1261 = vmatpush1.msra.mxu0 0.0
  %1262 = vmatprep.subr.mxu0 0.0
  %1263 = vmatpush1.msra.mxu0 0.0
  %1264 = vmatprep.subr.mxu0 0.0
  %1265 = vmatpush1.msra.mxu0 0.0
  %1266 = vmatprep.subr.mxu0 0.0
  %1267 = vmatpush1.msra.mxu0 0.0
  %1268 = vmatprep.subr.mxu0 0.0
  %1269 = vmatpush1.msra.mxu0 0.0
  %1270 = vmatprep.subr.mxu0 0.0
  %1271 = vmatpush1.msra.mxu0 0.0
  %1272 = vmatprep.subr.mxu0 0.0
  %1273 = vmatpush1.msra.mxu0 0.0
  %1274 = vmatprep.mubr.f32.mxu0 0.0
  %1275 = vmatmul.mubr.f32.gmra.mrb[0].mxu0 %v1131
  %v1276 = vpop.f32.mrb[0].mxu0
  %v1277 = vadd.f32 0.0, %v1276
  %v1278 = vpop.f32.mrb[0].mxu0
  %v1279 = vadd.f32 0.0, %v1278
  %1280 = vdwg.mxu0
  %v1281 = vadd.f32 %v1135, %v1206
  %v1282 = vadd.f32 %v1136, %v1208
  %v1283 = vadd.f32 %v1137, %v1277
  %v1284 = vadd.f32 %v1138, %v1279
  %v1285 = vxor.u32 %v1281, 2147483648
  %v1286 = vmul.f32 %v1285, 1.442695
  %v1287 = vpow.pop %v1286
  %v1288 = vadd.f32 %v1287, 1.0
  %v1289 = vrcp.pop %v1288
  %v1290 = vmul.f32 1.0, %v1289
  %v1291 = vxor.u32 %v1282, 2147483648
  %v1292 = vmul.f32 %v1291, 1.442695
  %v1293 = vpow.pop %v1292
  %v1294 = vadd.f32 %v1293, 1.0
  %v1295 = vrcp.pop %v1294
  %v1296 = vmul.f32 1.0, %v1295
  %v1297 = vtanh.pop %v1283
  %v1298 = vxor.u32 %v1284, 2147483648
  %v1299 = vmul.f32 %v1298, 1.442695
  %v1300 = vpow.pop %v1299
  %v1301 = vadd.f32 %v1300, 1.0
  %v1302 = vrcp.pop %v1301
  %v1303 = vmul.f32 1.0, %v1302
  %v1304 = vmul.f32 %v1296, %v1129
  %v1305 = vmul.f32 %v1290, %v1297
  %v1306 = vadd.f32 %v1304, %v1305
  %v1307 = vtanh.pop %v1306
  %v1308 = vmul.f32 %v1303, %v1307
  %s1309 = smul.u32 5, 4
  %s1310 = smul.addr %s1309, 8
  %s1311 = scalar_lea.vmem [#allocation4], %s1310
  %v1312 = vld [vmem:[%s1311] sm:$0xff]
  %v1313 = vld [vmem:[%s1311 + $0x8] sm:$0xff]
  %v1314 = vld [vmem:[%s1311 + $0x10] sm:$0xff]
  %v1315 = vld [vmem:[%s1311 + $0x18] sm:$0xff]
  %1316 = vmatprep.subr.mxu0 %v359
  %1317 = vmatpush1.msra.mxu0 %v358
  %1318 = vmatprep.subr.mxu0 %v363
  %1319 = vmatpush1.msra.mxu0 %v362
  %1320 = vmatprep.subr.mxu0 %v367
  %1321 = vmatpush1.msra.mxu0 %v366
  %1322 = vmatprep.subr.mxu0 %v371
  %1323 = vmatpush1.msra.mxu0 %v370
  %1324 = vmatprep.subr.mxu0 %v375
  %1325 = vmatpush1.msra.mxu0 %v374
  %1326 = vmatprep.subr.mxu0 %v379
  %1327 = vmatpush1.msra.mxu0 %v378
  %1328 = vmatprep.subr.mxu0 %v383
  %1329 = vmatpush1.msra.mxu0 %v382
  %1330 = vmatprep.subr.mxu0 %v387
  %1331 = vmatpush1.msra.mxu0 %v386
  %1332 = vmatprep.subr.mxu0 %v391
  %1333 = vmatpush1.msra.mxu0 %v390
  %1334 = vmatprep.subr.mxu0 %v395
  %1335 = vmatpush1.msra.mxu0 %v394
  %1336 = vmatprep.subr.mxu0 %v399
  %1337 = vmatpush1.msra.mxu0 %v398
  %1338 = vmatprep.subr.mxu0 %v403
  %1339 = vmatpush1.msra.mxu0 %v402
  %1340 = vmatprep.subr.mxu0 %v407
  %1341 = vmatpush1.msra.mxu0 %v406
  %1342 = vmatprep.subr.mxu0 %v411
  %1343 = vmatpush1.msra.mxu0 %v410
  %1344 = vmatprep.subr.mxu0 %v415
  %1345 = vmatpush1.msra.mxu0 %v414
  %1346 = vmatprep.subr.mxu0 %v419
  %1347 = vmatpush1.msra.mxu0 %v418
  %1348 = vmatprep.subr.mxu0 0.0
  %1349 = vmatpush1.msra.mxu0 0.0
  %1350 = vmatprep.subr.mxu0 0.0
  %1351 = vmatpush1.msra.mxu0 0.0
  %1352 = vmatprep.subr.mxu0 0.0
  %1353 = vmatpush1.msra.mxu0 0.0
  %1354 = vmatprep.subr.mxu0 0.0
  %1355 = vmatpush1.msra.mxu0 0.0
  %1356 = vmatprep.subr.mxu0 0.0
  %1357 = vmatpush1.msra.mxu0 0.0
  %1358 = vmatprep.subr.mxu0 0.0
  %1359 = vmatpush1.msra.mxu0 0.0
  %1360 = vmatprep.subr.mxu0 0.0
  %1361 = vmatpush1.msra.mxu0 0.0
  %1362 = vmatprep.subr.mxu0 0.0
  %1363 = vmatpush1.msra.mxu0 0.0
  %1364 = vmatprep.subr.mxu0 0.0
  %1365 = vmatpush1.msra.mxu0 0.0
  %1366 = vmatprep.subr.mxu0 0.0
  %1367 = vmatpush1.msra.mxu0 0.0
  %1368 = vmatprep.subr.mxu0 0.0
  %1369 = vmatpush1.msra.mxu0 0.0
  %1370 = vmatprep.subr.mxu0 0.0
  %1371 = vmatpush1.msra.mxu0 0.0
  %1372 = vmatprep.subr.mxu0 0.0
  %1373 = vmatpush1.msra.mxu0 0.0
  %1374 = vmatprep.subr.mxu0 0.0
  %1375 = vmatpush1.msra.mxu0 0.0
  %1376 = vmatprep.subr.mxu0 0.0
  %1377 = vmatpush1.msra.mxu0 0.0
  %1378 = vmatprep.subr.mxu0 0.0
  %1379 = vmatpush1.msra.mxu0 0.0
  %1380 = vmatprep.mubr.f32.mxu0 0.0
  %1381 = vmatmul.mubr.f32.gmra.mrb[0].mxu0 %v1308
  %v1382 = vpop.f32.mrb[0].mxu0
  %v1383 = vadd.f32 0.0, %v1382
  %v1384 = vpop.f32.mrb[0].mxu0
  %v1385 = vadd.f32 0.0, %v1384
  %1386 = vdwg.mxu0
  %1387 = vmatprep.subr.mxu0 %v361
  %1388 = vmatpush1.msra.mxu0 %v360
  %1389 = vmatprep.subr.mxu0 %v365
  %1390 = vmatpush1.msra.mxu0 %v364
  %1391 = vmatprep.subr.mxu0 %v369
  %1392 = vmatpush1.msra.mxu0 %v368
  %1393 = vmatprep.subr.mxu0 %v373
  %1394 = vmatpush1.msra.mxu0 %v372
  %1395 = vmatprep.subr.mxu0 %v377
  %1396 = vmatpush1.msra.mxu0 %v376
  %1397 = vmatprep.subr.mxu0 %v381
  %1398 = vmatpush1.msra.mxu0 %v380
  %1399 = vmatprep.subr.mxu0 %v385
  %1400 = vmatpush1.msra.mxu0 %v384
  %1401 = vmatprep.subr.mxu0 %v389
  %1402 = vmatpush1.msra.mxu0 %v388
  %1403 = vmatprep.subr.mxu0 %v393
  %1404 = vmatpush1.msra.mxu0 %v392
  %1405 = vmatprep.subr.mxu0 %v397
  %1406 = vmatpush1.msra.mxu0 %v396
  %1407 = vmatprep.subr.mxu0 %v401
  %1408 = vmatpush1.msra.mxu0 %v400
  %1409 = vmatprep.subr.mxu0 %v405
  %1410 = vmatpush1.msra.mxu0 %v404
  %1411 = vmatprep.subr.mxu0 %v409
  %1412 = vmatpush1.msra.mxu0 %v408
  %1413 = vmatprep.subr.mxu0 %v413
  %1414 = vmatpush1.msra.mxu0 %v412
  %1415 = vmatprep.subr.mxu0 %v417
  %1416 = vmatpush1.msra.mxu0 %v416
  %1417 = vmatprep.subr.mxu0 %v421
  %1418 = vmatpush1.msra.mxu0 %v420
  %1419 = vmatprep.subr.mxu0 0.0
  %1420 = vmatpush1.msra.mxu0 0.0
  %1421 = vmatprep.subr.mxu0 0.0
  %1422 = vmatpush1.msra.mxu0 0.0
  %1423 = vmatprep.subr.mxu0 0.0
  %1424 = vmatpush1.msra.mxu0 0.0
  %1425 = vmatprep.subr.mxu0 0.0
  %1426 = vmatpush1.msra.mxu0 0.0
  %1427 = vmatprep.subr.mxu0 0.0
  %1428 = vmatpush1.msra.mxu0 0.0
  %1429 = vmatprep.subr.mxu0 0.0
  %1430 = vmatpush1.msra.mxu0 0.0
  %1431 = vmatprep.subr.mxu0 0.0
  %1432 = vmatpush1.msra.mxu0 0.0
  %1433 = vmatprep.subr.mxu0 0.0
  %1434 = vmatpush1.msra.mxu0 0.0
  %1435 = vmatprep.subr.mxu0 0.0
  %1436 = vmatpush1.msra.mxu0 0.0
  %1437 = vmatprep.subr.mxu0 0.0
  %1438 = vmatpush1.msra.mxu0 0.0
  %1439 = vmatprep.subr.mxu0 0.0
  %1440 = vmatpush1.msra.mxu0 0.0
  %1441 = vmatprep.subr.mxu0 0.0
  %1442 = vmatpush1.msra.mxu0 0.0
  %1443 = vmatprep.subr.mxu0 0.0
  %1444 = vmatpush1.msra.mxu0 0.0
  %1445 = vmatprep.subr.mxu0 0.0
  %1446 = vmatpush1.msra.mxu0 0.0
  %1447 = vmatprep.subr.mxu0 0.0
  %1448 = vmatpush1.msra.mxu0 0.0
  %1449 = vmatprep.subr.mxu0 0.0
  %1450 = vmatpush1.msra.mxu0 0.0
  %1451 = vmatprep.mubr.f32.mxu0 0.0
  %1452 = vmatmul.mubr.f32.gmra.mrb[0].mxu0 %v1308
  %v1453 = vpop.f32.mrb[0].mxu0
  %v1454 = vadd.f32 0.0, %v1453
  %v1455 = vpop.f32.mrb[0].mxu0
  %v1456 = vadd.f32 0.0, %v1455
  %1457 = vdwg.mxu0
  %v1458 = vadd.f32 %v1312, %v1383
  %v1459 = vadd.f32 %v1313, %v1385
  %v1460 = vadd.f32 %v1314, %v1454
  %v1461 = vadd.f32 %v1315, %v1456
  %v1462 = vxor.u32 %v1458, 2147483648
  %v1463 = vmul.f32 %v1462, 1.442695
  %v1464 = vpow.pop %v1463
  %v1465 = vadd.f32 %v1464, 1.0
  %v1466 = vrcp.pop %v1465
  %v1467 = vmul.f32 1.0, %v1466
  %v1468 = vxor.u32 %v1459, 2147483648
  %v1469 = vmul.f32 %v1468, 1.442695
  %v1470 = vpow.pop %v1469
  %v1471 = vadd.f32 %v1470, 1.0
  %v1472 = vrcp.pop %v1471
  %v1473 = vmul.f32 1.0, %v1472
  %v1474 = vtanh.pop %v1460
  %v1475 = vxor.u32 %v1461, 2147483648
  %v1476 = vmul.f32 %v1475, 1.442695
  %v1477 = vpow.pop %v1476
  %v1478 = vadd.f32 %v1477, 1.0
  %v1479 = vrcp.pop %v1478
  %v1480 = vmul.f32 1.0, %v1479
  %v1481 = vmul.f32 %v1473, %v1306
  %v1482 = vmul.f32 %v1467, %v1474
  %v1483 = vadd.f32 %v1481, %v1482
  %v1484 = vtanh.pop %v1483
  %v1485 = vmul.f32 %v1480, %v1484
  %s1486 = smul.u32 6, 4
  %s1487 = smul.addr %s1486, 8
  %s1488 = scalar_lea.vmem [#allocation4], %s1487
  %v1489 = vld [vmem:[%s1488] sm:$0xff]
  %v1490 = vld [vmem:[%s1488 + $0x8] sm:$0xff]
  %v1491 = vld [vmem:[%s1488 + $0x10] sm:$0xff]
  %v1492 = vld [vmem:[%s1488 + $0x18] sm:$0xff]
  %1493 = vmatprep.subr.mxu0 %v359
  %1494 = vmatpush1.msra.mxu0 %v358
  %1495 = vmatprep.subr.mxu0 %v363
  %1496 = vmatpush1.msra.mxu0 %v362
  %1497 = vmatprep.subr.mxu0 %v367
  %1498 = vmatpush1.msra.mxu0 %v366
  %1499 = vmatprep.subr.mxu0 %v371
  %1500 = vmatpush1.msra.mxu0 %v370
  %1501 = vmatprep.subr.mxu0 %v375
  %1502 = vmatpush1.msra.mxu0 %v374
  %1503 = vmatprep.subr.mxu0 %v379
  %1504 = vmatpush1.msra.mxu0 %v378
  %1505 = vmatprep.subr.mxu0 %v383
  %1506 = vmatpush1.msra.mxu0 %v382
  %1507 = vmatprep.subr.mxu0 %v387
  %1508 = vmatpush1.msra.mxu0 %v386
  %1509 = vmatprep.subr.mxu0 %v391
  %1510 = vmatpush1.msra.mxu0 %v390
  %1511 = vmatprep.subr.mxu0 %v395
  %1512 = vmatpush1.msra.mxu0 %v394
  %1513 = vmatprep.subr.mxu0 %v399
  %1514 = vmatpush1.msra.mxu0 %v398
  %1515 = vmatprep.subr.mxu0 %v403
  %1516 = vmatpush1.msra.mxu0 %v402
  %1517 = vmatprep.subr.mxu0 %v407
  %1518 = vmatpush1.msra.mxu0 %v406
  %1519 = vmatprep.subr.mxu0 %v411
  %1520 = vmatpush1.msra.mxu0 %v410
  %1521 = vmatprep.subr.mxu0 %v415
  %1522 = vmatpush1.msra.mxu0 %v414
  %1523 = vmatprep.subr.mxu0 %v419
  %1524 = vmatpush1.msra.mxu0 %v418
  %1525 = vmatprep.subr.mxu0 0.0
  %1526 = vmatpush1.msra.mxu0 0.0
  %1527 = vmatprep.subr.mxu0 0.0
  %1528 = vmatpush1.msra.mxu0 0.0
  %1529 = vmatprep.subr.mxu0 0.0
  %1530 = vmatpush1.msra.mxu0 0.0
  %1531 = vmatprep.subr.mxu0 0.0
  %1532 = vmatpush1.msra.mxu0 0.0
  %1533 = vmatprep.subr.mxu0 0.0
  %1534 = vmatpush1.msra.mxu0 0.0
  %1535 = vmatprep.subr.mxu0 0.0
  %1536 = vmatpush1.msra.mxu0 0.0
  %1537 = vmatprep.subr.mxu0 0.0
  %1538 = vmatpush1.msra.mxu0 0.0
  %1539 = vmatprep.subr.mxu0 0.0
  %1540 = vmatpush1.msra.mxu0 0.0
  %1541 = vmatprep.subr.mxu0 0.0
  %1542 = vmatpush1.msra.mxu0 0.0
  %1543 = vmatprep.subr.mxu0 0.0
  %1544 = vmatpush1.msra.mxu0 0.0
  %1545 = vmatprep.subr.mxu0 0.0
  %1546 = vmatpush1.msra.mxu0 0.0
  %1547 = vmatprep.subr.mxu0 0.0
  %1548 = vmatpush1.msra.mxu0 0.0
  %1549 = vmatprep.subr.mxu0 0.0
  %1550 = vmatpush1.msra.mxu0 0.0
  %1551 = vmatprep.subr.mxu0 0.0
  %1552 = vmatpush1.msra.mxu0 0.0
  %1553 = vmatprep.subr.mxu0 0.0
  %1554 = vmatpush1.msra.mxu0 0.0
  %1555 = vmatprep.subr.mxu0 0.0
  %1556 = vmatpush1.msra.mxu0 0.0
  %1557 = vmatprep.mubr.f32.mxu0 0.0
  %1558 = vmatmul.mubr.f32.gmra.mrb[0].mxu0 %v1485
  %v1559 = vpop.f32.mrb[0].mxu0
  %v1560 = vadd.f32 0.0, %v1559
  %v1561 = vpop.f32.mrb[0].mxu0
  %v1562 = vadd.f32 0.0, %v1561
  %1563 = vdwg.mxu0
  %1564 = vmatprep.subr.mxu0 %v361
  %1565 = vmatpush1.msra.mxu0 %v360
  %1566 = vmatprep.subr.mxu0 %v365
  %1567 = vmatpush1.msra.mxu0 %v364
  %1568 = vmatprep.subr.mxu0 %v369
  %1569 = vmatpush1.msra.mxu0 %v368
  %1570 = vmatprep.subr.mxu0 %v373
  %1571 = vmatpush1.msra.mxu0 %v372
  %1572 = vmatprep.subr.mxu0 %v377
  %1573 = vmatpush1.msra.mxu0 %v376
  %1574 = vmatprep.subr.mxu0 %v381
  %1575 = vmatpush1.msra.mxu0 %v380
  %1576 = vmatprep.subr.mxu0 %v385
  %1577 = vmatpush1.msra.mxu0 %v384
  %1578 = vmatprep.subr.mxu0 %v389
  %1579 = vmatpush1.msra.mxu0 %v388
  %1580 = vmatprep.subr.mxu0 %v393
  %1581 = vmatpush1.msra.mxu0 %v392
  %1582 = vmatprep.subr.mxu0 %v397
  %1583 = vmatpush1.msra.mxu0 %v396
  %1584 = vmatprep.subr.mxu0 %v401
  %1585 = vmatpush1.msra.mxu0 %v400
  %1586 = vmatprep.subr.mxu0 %v405
  %1587 = vmatpush1.msra.mxu0 %v404
  %1588 = vmatprep.subr.mxu0 %v409
  %1589 = vmatpush1.msra.mxu0 %v408
  %1590 = vmatprep.subr.mxu0 %v413
  %1591 = vmatpush1.msra.mxu0 %v412
  %1592 = vmatprep.subr.mxu0 %v417
  %1593 = vmatpush1.msra.mxu0 %v416
  %1594 = vmatprep.subr.mxu0 %v421
  %1595 = vmatpush1.msra.mxu0 %v420
  %1596 = vmatprep.subr.mxu0 0.0
  %1597 = vmatpush1.msra.mxu0 0.0
  %1598 = vmatprep.subr.mxu0 0.0
  %1599 = vmatpush1.msra.mxu0 0.0
  %1600 = vmatprep.subr.mxu0 0.0
  %1601 = vmatpush1.msra.mxu0 0.0
  %1602 = vmatprep.subr.mxu0 0.0
  %1603 = vmatpush1.msra.mxu0 0.0
  %1604 = vmatprep.subr.mxu0 0.0
  %1605 = vmatpush1.msra.mxu0 0.0
  %1606 = vmatprep.subr.mxu0 0.0
  %1607 = vmatpush1.msra.mxu0 0.0
  %1608 = vmatprep.subr.mxu0 0.0
  %1609 = vmatpush1.msra.mxu0 0.0
  %1610 = vmatprep.subr.mxu0 0.0
  %1611 = vmatpush1.msra.mxu0 0.0
  %1612 = vmatprep.subr.mxu0 0.0
  %1613 = vmatpush1.msra.mxu0 0.0
  %1614 = vmatprep.subr.mxu0 0.0
  %1615 = vmatpush1.msra.mxu0 0.0
  %1616 = vmatprep.subr.mxu0 0.0
  %1617 = vmatpush1.msra.mxu0 0.0
  %1618 = vmatprep.subr.mxu0 0.0
  %1619 = vmatpush1.msra.mxu0 0.0
  %1620 = vmatprep.subr.mxu0 0.0
  %1621 = vmatpush1.msra.mxu0 0.0
  %1622 = vmatprep.subr.mxu0 0.0
  %1623 = vmatpush1.msra.mxu0 0.0
  %1624 = vmatprep.subr.mxu0 0.0
  %1625 = vmatpush1.msra.mxu0 0.0
  %1626 = vmatprep.subr.mxu0 0.0
  %1627 = vmatpush1.msra.mxu0 0.0
  %1628 = vmatprep.mubr.f32.mxu0 0.0
  %1629 = vmatmul.mubr.f32.gmra.mrb[0].mxu0 %v1485
  %v1630 = vpop.f32.mrb[0].mxu0
  %v1631 = vadd.f32 0.0, %v1630
  %v1632 = vpop.f32.mrb[0].mxu0
  %v1633 = vadd.f32 0.0, %v1632
  %1634 = vdwg.mxu0
  %v1635 = vadd.f32 %v1489, %v1560
  %v1636 = vadd.f32 %v1490, %v1562
  %v1637 = vadd.f32 %v1491, %v1631
  %v1638 = vadd.f32 %v1492, %v1633
  %v1639 = vxor.u32 %v1635, 2147483648
  %v1640 = vmul.f32 %v1639, 1.442695
  %v1641 = vpow.pop %v1640
  %v1642 = vadd.f32 %v1641, 1.0
  %v1643 = vrcp.pop %v1642
  %v1644 = vmul.f32 1.0, %v1643
  %v1645 = vxor.u32 %v1636, 2147483648
  %v1646 = vmul.f32 %v1645, 1.442695
  %v1647 = vpow.pop %v1646
  %v1648 = vadd.f32 %v1647, 1.0
  %v1649 = vrcp.pop %v1648
  %v1650 = vmul.f32 1.0, %v1649
  %v1651 = vtanh.pop %v1637
  %v1652 = vxor.u32 %v1638, 2147483648
  %v1653 = vmul.f32 %v1652, 1.442695
  %v1654 = vpow.pop %v1653
  %v1655 = vadd.f32 %v1654, 1.0
  %v1656 = vrcp.pop %v1655
  %v1657 = vmul.f32 1.0, %v1656
  %v1658 = vmul.f32 %v1650, %v1483
  %v1659 = vmul.f32 %v1644, %v1651
  %v1660 = vadd.f32 %v1658, %v1659
  %v1661 = vtanh.pop %v1660
  %v1662 = vmul.f32 %v1657, %v1661
  %s1663 = smul.u32 7, 4
  %s1664 = smul.addr %s1663, 8
  %s1665 = scalar_lea.vmem [#allocation4], %s1664
  %v1666 = vld [vmem:[%s1665] sm:$0xff]
  %v1667 = vld [vmem:[%s1665 + $0x8] sm:$0xff]
  %v1668 = vld [vmem:[%s1665 + $0x10] sm:$0xff]
  %v1669 = vld [vmem:[%s1665 + $0x18] sm:$0xff]
  %1670 = vmatprep.subr.mxu0 %v359
  %1671 = vmatpush1.msra.mxu0 %v358
  %1672 = vmatprep.subr.mxu0 %v363
  %1673 = vmatpush1.msra.mxu0 %v362
  %1674 = vmatprep.subr.mxu0 %v367
  %1675 = vmatpush1.msra.mxu0 %v366
  %1676 = vmatprep.subr.mxu0 %v371
  %1677 = vmatpush1.msra.mxu0 %v370
  %1678 = vmatprep.subr.mxu0 %v375
  %1679 = vmatpush1.msra.mxu0 %v374
  %1680 = vmatprep.subr.mxu0 %v379
  %1681 = vmatpush1.msra.mxu0 %v378
  %1682 = vmatprep.subr.mxu0 %v383
  %1683 = vmatpush1.msra.mxu0 %v382
  %1684 = vmatprep.subr.mxu0 %v387
  %1685 = vmatpush1.msra.mxu0 %v386
  %1686 = vmatprep.subr.mxu0 %v391
  %1687 = vmatpush1.msra.mxu0 %v390
  %1688 = vmatprep.subr.mxu0 %v395
  %1689 = vmatpush1.msra.mxu0 %v394
  %1690 = vmatprep.subr.mxu0 %v399
  %1691 = vmatpush1.msra.mxu0 %v398
  %1692 = vmatprep.subr.mxu0 %v403
  %1693 = vmatpush1.msra.mxu0 %v402
  %1694 = vmatprep.subr.mxu0 %v407
  %1695 = vmatpush1.msra.mxu0 %v406
  %1696 = vmatprep.subr.mxu0 %v411
  %1697 = vmatpush1.msra.mxu0 %v410
  %1698 = vmatprep.subr.mxu0 %v415
  %1699 = vmatpush1.msra.mxu0 %v414
  %1700 = vmatprep.subr.mxu0 %v419
  %1701 = vmatpush1.msra.mxu0 %v418
  %1702 = vmatprep.subr.mxu0 0.0
  %1703 = vmatpush1.msra.mxu0 0.0
  %1704 = vmatprep.subr.mxu0 0.0
  %1705 = vmatpush1.msra.mxu0 0.0
  %1706 = vmatprep.subr.mxu0 0.0
  %1707 = vmatpush1.msra.mxu0 0.0
  %1708 = vmatprep.subr.mxu0 0.0
  %1709 = vmatpush1.msra.mxu0 0.0
  %1710 = vmatprep.subr.mxu0 0.0
  %1711 = vmatpush1.msra.mxu0 0.0
  %1712 = vmatprep.subr.mxu0 0.0
  %1713 = vmatpush1.msra.mxu0 0.0
  %1714 = vmatprep.subr.mxu0 0.0
  %1715 = vmatpush1.msra.mxu0 0.0
  %1716 = vmatprep.subr.mxu0 0.0
  %1717 = vmatpush1.msra.mxu0 0.0
  %1718 = vmatprep.subr.mxu0 0.0
  %1719 = vmatpush1.msra.mxu0 0.0
  %1720 = vmatprep.subr.mxu0 0.0
  %1721 = vmatpush1.msra.mxu0 0.0
  %1722 = vmatprep.subr.mxu0 0.0
  %1723 = vmatpush1.msra.mxu0 0.0
  %1724 = vmatprep.subr.mxu0 0.0
  %1725 = vmatpush1.msra.mxu0 0.0
  %1726 = vmatprep.subr.mxu0 0.0
  %1727 = vmatpush1.msra.mxu0 0.0
  %1728 = vmatprep.subr.mxu0 0.0
  %1729 = vmatpush1.msra.mxu0 0.0
  %1730 = vmatprep.subr.mxu0 0.0
  %1731 = vmatpush1.msra.mxu0 0.0
  %1732 = vmatprep.subr.mxu0 0.0
  %1733 = vmatpush1.msra.mxu0 0.0
  %1734 = vmatprep.mubr.f32.mxu0 0.0
  %1735 = vmatmul.mubr.f32.gmra.mrb[0].mxu0 %v1662
  %v1736 = vpop.f32.mrb[0].mxu0
  %v1737 = vadd.f32 0.0, %v1736
  %v1738 = vpop.f32.mrb[0].mxu0
  %v1739 = vadd.f32 0.0, %v1738
  %1740 = vdwg.mxu0
  %1741 = vmatprep.subr.mxu0 %v361
  %1742 = vmatpush1.msra.mxu0 %v360
  %1743 = vmatprep.subr.mxu0 %v365
  %1744 = vmatpush1.msra.mxu0 %v364
  %1745 = vmatprep.subr.mxu0 %v369
  %1746 = vmatpush1.msra.mxu0 %v368
  %1747 = vmatprep.subr.mxu0 %v373
  %1748 = vmatpush1.msra.mxu0 %v372
  %1749 = vmatprep.subr.mxu0 %v377
  %1750 = vmatpush1.msra.mxu0 %v376
  %1751 = vmatprep.subr.mxu0 %v381
  %1752 = vmatpush1.msra.mxu0 %v380
  %1753 = vmatprep.subr.mxu0 %v385
  %1754 = vmatpush1.msra.mxu0 %v384
  %1755 = vmatprep.subr.mxu0 %v389
  %1756 = vmatpush1.msra.mxu0 %v388
  %1757 = vmatprep.subr.mxu0 %v393
  %1758 = vmatpush1.msra.mxu0 %v392
  %1759 = vmatprep.subr.mxu0 %v397
  %1760 = vmatpush1.msra.mxu0 %v396
  %1761 = vmatprep.subr.mxu0 %v401
  %1762 = vmatpush1.msra.mxu0 %v400
  %1763 = vmatprep.subr.mxu0 %v405
  %1764 = vmatpush1.msra.mxu0 %v404
  %1765 = vmatprep.subr.mxu0 %v409
  %1766 = vmatpush1.msra.mxu0 %v408
  %1767 = vmatprep.subr.mxu0 %v413
  %1768 = vmatpush1.msra.mxu0 %v412
  %1769 = vmatprep.subr.mxu0 %v417
  %1770 = vmatpush1.msra.mxu0 %v416
  %1771 = vmatprep.subr.mxu0 %v421
  %1772 = vmatpush1.msra.mxu0 %v420
  %1773 = vmatprep.subr.mxu0 0.0
  %1774 = vmatpush1.msra.mxu0 0.0
  %1775 = vmatprep.subr.mxu0 0.0
  %1776 = vmatpush1.msra.mxu0 0.0
  %1777 = vmatprep.subr.mxu0 0.0
  %1778 = vmatpush1.msra.mxu0 0.0
  %1779 = vmatprep.subr.mxu0 0.0
  %1780 = vmatpush1.msra.mxu0 0.0
  %1781 = vmatprep.subr.mxu0 0.0
  %1782 = vmatpush1.msra.mxu0 0.0
  %1783 = vmatprep.subr.mxu0 0.0
  %1784 = vmatpush1.msra.mxu0 0.0
  %1785 = vmatprep.subr.mxu0 0.0
  %1786 = vmatpush1.msra.mxu0 0.0
  %1787 = vmatprep.subr.mxu0 0.0
  %1788 = vmatpush1.msra.mxu0 0.0
  %1789 = vmatprep.subr.mxu0 0.0
  %1790 = vmatpush1.msra.mxu0 0.0
  %1791 = vmatprep.subr.mxu0 0.0
  %1792 = vmatpush1.msra.mxu0 0.0
  %1793 = vmatprep.subr.mxu0 0.0
  %1794 = vmatpush1.msra.mxu0 0.0
  %1795 = vmatprep.subr.mxu0 0.0
  %1796 = vmatpush1.msra.mxu0 0.0
  %1797 = vmatprep.subr.mxu0 0.0
  %1798 = vmatpush1.msra.mxu0 0.0
  %1799 = vmatprep.subr.mxu0 0.0
  %1800 = vmatpush1.msra.mxu0 0.0
  %1801 = vmatprep.subr.mxu0 0.0
  %1802 = vmatpush1.msra.mxu0 0.0
  %1803 = vmatprep.subr.mxu0 0.0
  %1804 = vmatpush1.msra.mxu0 0.0
  %1805 = vmatprep.mubr.f32.mxu0 0.0
  %1806 = vmatmul.mubr.f32.gmra.mrb[0].mxu0 %v1662
  %v1807 = vpop.f32.mrb[0].mxu0
  %v1808 = vadd.f32 0.0, %v1807
  %v1809 = vpop.f32.mrb[0].mxu0
  %v1810 = vadd.f32 0.0, %v1809
  %1811 = vdwg.mxu0
  %v1812 = vadd.f32 %v1666, %v1737
  %v1813 = vadd.f32 %v1667, %v1739
  %v1814 = vadd.f32 %v1668, %v1808
  %v1815 = vadd.f32 %v1669, %v1810
  %v1816 = vxor.u32 %v1812, 2147483648
  %v1817 = vmul.f32 %v1816, 1.442695
  %v1818 = vpow.pop %v1817
  %v1819 = vadd.f32 %v1818, 1.0
  %v1820 = vrcp.pop %v1819
  %v1821 = vmul.f32 1.0, %v1820
  %v1822 = vxor.u32 %v1813, 2147483648
  %v1823 = vmul.f32 %v1822, 1.442695
  %v1824 = vpow.pop %v1823
  %v1825 = vadd.f32 %v1824, 1.0
  %v1826 = vrcp.pop %v1825
  %v1827 = vmul.f32 1.0, %v1826
  %v1828 = vtanh.pop %v1814
  %v1829 = vxor.u32 %v1815, 2147483648
  %v1830 = vmul.f32 %v1829, 1.442695
  %v1831 = vpow.pop %v1830
  %v1832 = vadd.f32 %v1831, 1.0
  %v1833 = vrcp.pop %v1832
  %v1834 = vmul.f32 1.0, %v1833
  %v1835 = vmul.f32 %v1827, %v1660
  %v1836 = vmul.f32 %v1821, %v1828
  %v1837 = vadd.f32 %v1835, %v1836
  %v1838 = vtanh.pop %v1837
  %v1839 = vmul.f32 %v1834, %v1838
  %p1840 = scmp.lt.s32.totalorder 0, 0
  // Predicated region
  $region30: #{text_subnet_forward.1} parent=0 // pred_check
    %p1841 = pneg %p1840
  $region31: #{text_subnet_forward.1} parent=0 // pred_check_branch
    %1843 = sbr.rel (%p1841) target = $region33
  $region32: #{text_subnet_forward.1} parent=0 // pred_region
    %1844 = vst [vmem:[#allocation2] sm:$0xff] %v1839
    %1845 = vst [vmem:[#allocation3] sm:$0xff] %v1837
  $region33: #{text_subnet_forward.1} parent=0 // pred_fallthru
    _
  // Predicated region
  $region34: #{text_subnet_forward.1} parent=0 // pred_check
    %p1846 = pneg %p23
  $region35: #{text_subnet_forward.1} parent=0 // pred_check_branch
    %1848 = sbr.rel (%p1846) target = $region37
  $region36: #{text_subnet_forward.1} parent=0 // pred_region
    %v1849 = vld [vmem:[%s4] sm:$0xff]
    %v1850 = vld [vmem:[%s4 + $0x8] sm:$0xff]
    %v1851 = vld [vmem:[%s4 + $0x10] sm:$0xff]
    %v1852 = vld [vmem:[%s4 + $0x18] sm:$0xff]
    %v1853 = vld [vmem:[%s4 + $0x20] sm:$0xff]
    %v1854 = vld [vmem:[%s4 + $0x28] sm:$0xff]
    %v1855 = vld [vmem:[%s4 + $0x30] sm:$0xff]
    %v1856 = vld [vmem:[%s4 + $0x38] sm:$0xff]
    %v1857 = vld [vmem:[%s4 + $0x40] sm:$0xff]
    %v1858 = vld [vmem:[%s4 + $0x48] sm:$0xff]
    %v1859 = vld [vmem:[%s4 + $0x50] sm:$0xff]
    %v1860 = vld [vmem:[%s4 + $0x58] sm:$0xff]
    %v1861 = vld [vmem:[%s4 + $0x60] sm:$0xff]
    %v1862 = vld [vmem:[%s4 + $0x68] sm:$0xff]
    %v1863 = vld [vmem:[%s4 + $0x70] sm:$0xff]
    %v1864 = vld [vmem:[%s4 + $0x78] sm:$0xff]
    %v1865 = vld [vmem:[%s5] sm:$0x1]
    %v1867 = vlaneseq
    %v1868 = vshrl.u32 %v1867, 7
    %v1869 = vsub.s32 0, %v1868
    %v1870 = vrot.slane %v1865, %v1869
    %1872 = vmatprep.subr.mxu0 0.0
    %1873 = vmatpush1.msra.mxu0 %v1849
    %1874 = vmatprep.subr.mxu0 0.0
    %1875 = vmatpush1.msra.mxu0 %v1850
    %1876 = vmatprep.subr.mxu0 0.0
    %1877 = vmatpush1.msra.mxu0 %v1851
    %1878 = vmatprep.subr.mxu0 0.0
    %1879 = vmatpush1.msra.mxu0 %v1852
    %1880 = vmatprep.subr.mxu0 0.0
    %1881 = vmatpush1.msra.mxu0 %v1853
    %1882 = vmatprep.subr.mxu0 0.0
    %1883 = vmatpush1.msra.mxu0 %v1854
    %1884 = vmatprep.subr.mxu0 0.0
    %1885 = vmatpush1.msra.mxu0 %v1855
    %1886 = vmatprep.subr.mxu0 0.0
    %1887 = vmatpush1.msra.mxu0 %v1856
    %1888 = vmatprep.subr.mxu0 0.0
    %1889 = vmatpush1.msra.mxu0 %v1857
    %1890 = vmatprep.subr.mxu0 0.0
    %1891 = vmatpush1.msra.mxu0 %v1858
    %1892 = vmatprep.subr.mxu0 0.0
    %1893 = vmatpush1.msra.mxu0 %v1859
    %1894 = vmatprep.subr.mxu0 0.0
    %1895 = vmatpush1.msra.mxu0 %v1860
    %1896 = vmatprep.subr.mxu0 0.0
    %1897 = vmatpush1.msra.mxu0 %v1861
    %1898 = vmatprep.subr.mxu0 0.0
    %1899 = vmatpush1.msra.mxu0 %v1862
    %1900 = vmatprep.subr.mxu0 0.0
    %1901 = vmatpush1.msra.mxu0 %v1863
    %1902 = vmatprep.subr.mxu0 0.0
    %1903 = vmatpush1.msra.mxu0 %v1864
    %1904 = vmatprep.subr.mxu0 0.0
    %1905 = vmatpush1.msra.mxu0 0.0
    %1906 = vmatprep.subr.mxu0 0.0
    %1907 = vmatpush1.msra.mxu0 0.0
    %1908 = vmatprep.subr.mxu0 0.0
    %1909 = vmatpush1.msra.mxu0 0.0
    %1910 = vmatprep.subr.mxu0 0.0
    %1911 = vmatpush1.msra.mxu0 0.0
    %1912 = vmatprep.subr.mxu0 0.0
    %1913 = vmatpush1.msra.mxu0 0.0
    %1914 = vmatprep.subr.mxu0 0.0
    %1915 = vmatpush1.msra.mxu0 0.0
    %1916 = vmatprep.subr.mxu0 0.0
    %1917 = vmatpush1.msra.mxu0 0.0
    %1918 = vmatprep.subr.mxu0 0.0
    %1919 = vmatpush1.msra.mxu0 0.0
    %1920 = vmatprep.subr.mxu0 0.0
    %1921 = vmatpush1.msra.mxu0 0.0
    %1922 = vmatprep.subr.mxu0 0.0
    %1923 = vmatpush1.msra.mxu0 0.0
    %1924 = vmatprep.subr.mxu0 0.0
    %1925 = vmatpush1.msra.mxu0 0.0
    %1926 = vmatprep.subr.mxu0 0.0
    %1927 = vmatpush1.msra.mxu0 0.0
    %1928 = vmatprep.subr.mxu0 0.0
    %1929 = vmatpush1.msra.mxu0 0.0
    %1930 = vmatprep.subr.mxu0 0.0
    %1931 = vmatpush1.msra.mxu0 0.0
    %1932 = vmatprep.subr.mxu0 0.0
    %1933 = vmatpush1.msra.mxu0 0.0
    %1934 = vmatprep.subr.mxu0 0.0
    %1935 = vmatpush1.msra.mxu0 0.0
    %1936 = vmatprep.mubr.f32.mxu0 0.0
    %1937 = vmatmul.mubr.f32.gmra.mrb[0].mxu0 %v1839
    %v1938 = vpop.f32.mrb[0].mxu0
    %v1939 = vadd.f32 %v1870, %v1938
    %v1940 = vpop.f32.mrb[0].mxu0
    %1941 = vdwg.mxu0
    %1942 = vst [vmem:[%s6] sm:$0xff] %v1939
  $region37: #{text_subnet_forward.1} parent=0 // pred_fallthru
    _
  // Predicated region
  $region38: #{text_subnet_forward.1} parent=0 // pred_check
    _
  $region39: #{text_subnet_forward.1} parent=0 // pred_check_branch
    %1944 = sbr.rel (0) target = $region41
  $region40: #{text_subnet_forward.1} parent=0 // pred_region
    _
  $region41: #{text_subnet_forward.1} parent=0 // pred_fallthru
    _
  // Predicated region
  $region42: #{text_subnet_forward.1} parent=0 // pred_check
    _
  $region43: #{text_subnet_forward.1} parent=0 // pred_check_branch
    %1946 = sbr.rel (0) target = $region45
  $region44: #{text_subnet_forward.1} parent=0 // pred_region
    _
  $region45: #{text_subnet_forward.1} parent=0 // pred_fallthru
    _

</llo_original>
